<compile_context>
chip_gen: v5e
topology: v5e:2x2
jax: 0.10.0
libtpu: 0.0.40
codegen_flags: <defaults>
</compile_context>

<pallas_src>
import math

import jax
import jax.numpy as jnp
from jax.experimental import pallas as pl
from jax.experimental.pallas import tpu as pltpu

NEG_SLOPE = 0.01  # PyTorch nn.LeakyReLU() default


def _round_up(v, m):
    return ((v + m - 1) // m) * m


def _lane_halo(W, K):
    """Zero-halo width (in flattened-pixel lanes) for a KxK 'same' conv,
    rounded up to a multiple of 128 so image starts stay lane-aligned."""
    p = K // 2
    return max(128, _round_up(p * W + p, 128))


def make_feature_stract_kernel(H, W, K, C, G):
    HW = H * W
    p = K // 2
    halo = _lane_halo(W, K)
    SLOT = HW + halo              # stride between image starts in the pad buffer
    C2 = 2 * C
    KK2C = K * K * C2

    # Row offsets of each (fused) conv inside the packed weight / bias slabs.
    R13, R24, R6, R55 = 0, C2, 2 * C2, 2 * C2 + C

    def leaky(v):
        return jnp.where(v >= 0, v, NEG_SLOPE * v)

    def kernel(x_ref, w_ref, b_ref, m_ref, o_ref, pad_ref, col_ref):
        # Zero the padded scratch every step: the halos must be zero for every
        # conv, and the lower (zero-weight) input channels are read by the
        # first conv's im2col before they are written.  Scratch is per-core,
        # so this cannot be hoisted behind program_id == 0 when the grid is
        # split across TensorCores; it is only ~28 KiB of aligned stores.
        pad_ref[...] = jnp.zeros_like(pad_ref)

        def build_im2col():
            # K*K taps x G images.  The zero halo handles out-of-range rows;
            # the precomputed column mask handles row-wrap of kx != p taps.
            # Writes into col_ref are 8-sublane / 128-lane aligned.
            for ky in range(K):
                for kx in range(K):
                    t = ky * K + kx
                    d = (ky - p) * W + (kx - p)
                    for g in range(G):
                        s = pad_ref[:, pl.ds(halo + g * SLOT + d, HW)]  # (2C, HW)
                        if kx != p:
                            s = s * m_ref[kx:kx + 1, :]
                        col_ref[pl.ds(t * C2, C2), pl.ds(g * HW, HW)] = s

        def conv_from_pad(row0, cout):
            # One im2col build + ONE MXU matmul per KxK conv.
            build_im2col()
            w = w_ref[row0:row0 + cout, 0:KK2C]                 # static slice
            y = jnp.dot(w, col_ref[...], preferred_element_type=jnp.float32)
            return leaky(y + b_ref[row0:row0 + cout, :])        # (cout, G*HW)

        # ---- conv1 & conv3 (shared input x), fused along Cout -------------
        # Lower pad rows (channels C..2C-1) are zero this step; their weight
        # columns are zero anyway.
        for g in range(G):
            pad_ref[0:C, pl.ds(halo + g * SLOT, HW)] = x_ref[g].astype(jnp.float32)
        y13 = conv_from_pad(R13, C2)                            # (2C, G*HW)

        # ---- conv2 & conv4, block-diagonal over the 2C activation ---------
        for g in range(G):
            pad_ref[0:C2, pl.ds(halo + g * SLOT, HW)] = y13[:, g * HW:(g + 1) * HW]
        y24 = conv_from_pad(R24, C2)                            # (2C, G*HW)

        # ---- conv5 & conv5_, block-diagonal 1x1 (plain matmul) -------------
        y55 = leaky(jnp.dot(w_ref[R55:R55 + C2, 0:C2], y24,
                            preferred_element_type=jnp.float32)
                    + b_ref[R55:R55 + C2, :])                   # (2C, G*HW)

        # ---- residual x1 + x2 + x, then conv6 ------------------------------
        for g in range(G):
            pad_ref[0:C, pl.ds(halo + g * SLOT, HW)] = (
                y55[0:C, g * HW:(g + 1) * HW]
                + y55[C:C2, g * HW:(g + 1) * HW]
                + x_ref[g].astype(jnp.float32))
        y = conv_from_pad(R6, C)                                # (C, G*HW)

        for g in range(G):
            o_ref[g] = y[:, g * HW:(g + 1) * HW].astype(o_ref.dtype)

    return kernel


# ----------------------------- wrapper --------------------------------------

def _pack_weights(params, K, C):
    """Pack the 7 convs into one (rows, 128-padded) weight slab + bias slab.

    Contraction layout for the KxK convs: column index = tap*2C + channel,
    tap = ky*K + kx, channel indexes the 2C-row activation in the pad buffer.
    """
    (w1, b1), (w2, b2), (w3, b3), (w4, b4), (w5, b5), (w5_, b5_), (w6, b6) = params
    C2 = 2 * C
    KK2C = K * K * C2

    def wide(w, ci_off):
        # (K, K, C, Cout) -> (Cout, K*K*2C) with channels at [ci_off, ci_off+C)
        cout = w.shape[-1]
        wt = jnp.transpose(w, (3, 0, 1, 2)).astype(jnp.float32).reshape(cout, K * K, C)
        z = jnp.zeros((cout, K * K, C), jnp.float32)
        full = jnp.concatenate([wt, z] if ci_off == 0 else [z, wt], axis=2)
        return full.reshape(cout, KK2C)

    def pointwise(w):   # (1,1,Cin,Cout) -> (Cout, Cin)
        return jnp.transpose(w, (3, 0, 1, 2)).astype(jnp.float32).reshape(w.shape[-1], -1)

    wA = jnp.concatenate([wide(w1, 0), wide(w3, 0)], axis=0)     # conv1 | conv3
    wB = jnp.concatenate([wide(w2, 0), wide(w4, C)], axis=0)     # conv2 | conv4 (block-diag)
    wC = wide(w6, 0)                                             # conv6
    wD = jnp.zeros((C2, KK2C), jnp.float32)                      # conv5 | conv5_ (block-diag 1x1)
    wD = wD.at[0:C, 0:C].set(pointwise(w5))
    wD = wD.at[C:C2, C:C2].set(pointwise(w5_))

    wslab = jnp.concatenate([wA, wB, wC, wD], axis=0)            # (7C, KK2C)
    bslab = jnp.concatenate([b1, b3, b2, b4, b6, b5, b5_]).astype(jnp.float32)[:, None]

    rows = _round_up(7 * C, 8)
    cols = _round_up(KK2C, 128)
    wslab = jnp.pad(wslab, ((0, rows - 7 * C), (0, cols - KK2C)))
    bslab = jnp.pad(bslab, ((0, rows - 7 * C), (0, 0)))
    return wslab, bslab


def _column_mask(H, W, K):
    """(K, H*W) f32 mask: 1 where the kx-shifted column stays inside the row."""
    HW = H * W
    p = K // 2
    col = jnp.arange(HW, dtype=jnp.int32) % W
    rows = [(((col + kx - p) >= 0) & ((col + kx - p) < W)).astype(jnp.float32)
            for kx in range(K)]
    m = jnp.stack(rows, axis=0)
    return jnp.pad(m, ((0, _round_up(K, 8) - K), (0, 0)))


def feature_stract_forward(x_nchw, params, kernel_size, images_per_step=None):
    """Matches FeatureStract.forward.  x_nchw: (N, C, H, W)."""
    N, C, H, W = x_nchw.shape
    K = kernel_size
    assert K % 2 == 1, "'same' padding path only implemented for odd kernel_size"
    assert params[0][0].shape[-1] == C, "module requires in_chan == out_chan"
    HW = H * W
    C2 = 2 * C
    KK2C = K * K * C2

    # Group size: lane-batch the whole (tiny) batch into one step; for larger
    # batches keep >= 2 grid steps so both v7x TensorCores get work.
    if images_per_step is None:
        images_per_step = N if N < 4 else min(8, (N + 1) // 2)
    G = max(1, min(images_per_step, N))
    steps = -(-N // G)
    Npad = steps * G

    x = x_nchw.reshape(N, C, HW)          # free reshape, NCHW is contiguous
    if Npad != N:
        x = jnp.pad(x, ((0, Npad - N), (0, 0), (0, 0)))

    wslab, bslab = _pack_weights(params, K, C)
    mask = _column_mask(H, W, K)

    halo = _lane_halo(W, K)
    padtot = G * (HW + halo) + halo

    kernel = make_feature_stract_kernel(H, W, K, C, G)
    const2 = lambda n: (0, 0)

    out = pl.pallas_call(
        kernel,
        out_shape=jax.ShapeDtypeStruct((Npad, C, HW), x_nchw.dtype),
        grid=(steps,),
        in_specs=[
            pl.BlockSpec((G, C, HW), lambda n: (n, 0, 0)),
            pl.BlockSpec(wslab.shape, const2),     # packed weights, resident
            pl.BlockSpec(bslab.shape, const2),     # packed biases,  resident
            pl.BlockSpec(mask.shape, const2),      # kx column mask, resident
        ],
        out_specs=pl.BlockSpec((G, C, HW), lambda n: (n, 0, 0)),
        scratch_shapes=[
            pltpu.VMEM((C2, padtot), jnp.float32),     # zero-halo padded activation
            pltpu.VMEM((KK2C, G * HW), jnp.float32),   # im2col buffer
        ],
        compiler_params=pltpu.CompilerParams(
            dimension_semantics=("parallel",),          # batch-group axis
            vmem_limit_bytes=32 * 1024 * 1024,          # safe on v5e/v6e/v7x
        ),
    )(x, wslab, bslab, mask)

    return out[:N].reshape(N, C, H, W)


# ----------------------------- init / reference -----------------------------

def init_conv(key, k, cin, cout):
    """Deterministic init mimicking PyTorch Conv2d default (uniform +-1/sqrt(fan_in))."""
    kw, kb = jax.random.split(key)
    fan_in = cin * k * k
    bound = 1.0 / math.sqrt(fan_in)
    w = jax.random.uniform(kw, (k, k, cin, cout), jnp.float32, -bound, bound)
    b = jax.random.uniform(kb, (cout,), jnp.float32, -bound, bound)
    return w, b


def init_feature_stract_params(key, kernel_size, in_chan, out_chan):
    keys = jax.random.split(key, 7)
    ks = [kernel_size, kernel_size, kernel_size, kernel_size, 1, 1, kernel_size]
    return [init_conv(kk, k, in_chan, out_chan) for kk, k in zip(keys, ks)]


def _reference_conv_leaky(x, w, b, k):
    p = k // 2
    y = jax.lax.conv_general_dilated(
        x, w, window_strides=(1, 1), padding=[(p, p), (p, p)],
        dimension_numbers=("NCHW", "HWIO", "NCHW"),
        precision=jax.lax.Precision.HIGHEST,
    ) + b.reshape(1, -1, 1, 1)
    return jnp.where(y >= 0, y, NEG_SLOPE * y)


def _reference_forward(x, params, k):
    c1, c2, c3, c4, c5, c5_, c6 = params
    x1 = _reference_conv_leaky(x, *c1, k)
    x1 = _reference_conv_leaky(x1, *c2, k)
    x1 = _reference_conv_leaky(x1, *c5, 1)
    x2 = _reference_conv_leaky(x, *c3, k)
    x2 = _reference_conv_leaky(x2, *c4, k)
    x2 = _reference_conv_leaky(x2, *c5_, 1)
    return _reference_conv_leaky(x1 + x2 + x, *c6, k)


if __name__ == "__main__":
    N, C, H, W = 2, 4, 16, 16
    kernel_size = 3

    key = jax.random.PRNGKey(0)
    kx, kp = jax.random.split(key)

    x_nchw = jax.random.normal(kx, (N, C, H, W), jnp.float32)   # PyTorch-style NCHW
    params = init_feature_stract_params(kp, kernel_size, C, C)

    out = feature_stract_forward(x_nchw, params, kernel_size)
    out = jax.block_until_ready(out)

    ref = _reference_forward(x_nchw, params, kernel_size)
    assert out.shape == (N, C, H, W)
    assert jnp.allclose(out, ref, atol=1e-4, rtol=1e-4), "mismatch vs reference"

    print("KERNEL_OK")
</pallas_src>

<mosaic_0001>
module attributes {stable_mosaic.version = 11 : i64} {
  func.func @kernel(%arg0: i32, %arg1: memref<2x4x256xf32, #tpu.memory_space<vmem>>, %arg2: memref<32x128xf32, #tpu.memory_space<vmem>>, %arg3: memref<32x1xf32, #tpu.memory_space<vmem>>, %arg4: memref<8x256xf32, #tpu.memory_space<vmem>>, %arg5: memref<2x4x256xf32, #tpu.memory_space<vmem>>, %arg6: memref<8x896xf32, #tpu.memory_space<vmem>>, %arg7: memref<72x512xf32, #tpu.memory_space<vmem>>) attributes {dimension_semantics = [#tpu.dimension_semantics<parallel>], iteration_bounds = array<i64: 1>, scalar_prefetch = 0 : i64, scratch_operands = 2 : i64, tpu.core_type = #tpu.core_type<tc>, window_params = [{transform_indices = @transform_0, window_bounds = array<i64: 2, 4, 256>}, {pipeline_mode = #tpu.pipeline_mode<synchronous>, transform_indices = @transform_1, window_bounds = array<i64: 32, 128>}, {pipeline_mode = #tpu.pipeline_mode<synchronous>, transform_indices = @transform_2, window_bounds = array<i64: 32, 1>}, {pipeline_mode = #tpu.pipeline_mode<synchronous>, transform_indices = @transform_3, window_bounds = array<i64: 8, 256>}, {transform_indices = @transform_4, window_bounds = array<i64: 2, 4, 256>}]} {
    %cst = arith.constant 0.000000e+00 : f32
    %0 = vector.broadcast %cst : f32 to vector<8x896xf32>
    %c0 = arith.constant 0 : index
    %c0_0 = arith.constant 0 : index
    %1 = vector.load %arg6[%c0, %c0_0] : memref<8x896xf32, #tpu.memory_space<vmem>>, vector<8x896xf32>
    tpu.vector_store %arg6[%c0, %c0_0], %0 {strides = array<i32>} : memref<8x896xf32, #tpu.memory_space<vmem>>, vector<8x896xf32>,
    %c0_1 = arith.constant 0 : index
    %c0_2 = arith.constant 0 : index
    %c0_3 = arith.constant 0 : index
    %2 = vector.load %arg1[%c0_1, %c0_2, %c0_3] : memref<2x4x256xf32, #tpu.memory_space<vmem>>, vector<1x4x256xf32>
    %3 = vector.shape_cast %2 : vector<1x4x256xf32> to vector<4x256xf32>
    %c0_4 = arith.constant 0 : index
    %c128 = arith.constant 128 : index
    %4 = vector.load %arg6[%c0_4, %c128] : memref<8x896xf32, #tpu.memory_space<vmem>>, vector<4x256xf32>
    tpu.vector_store %arg6[%c0_4, %c128], %3 {strides = array<i32>} : memref<8x896xf32, #tpu.memory_space<vmem>>, vector<4x256xf32>,
    %c1 = arith.constant 1 : index
    %c0_5 = arith.constant 0 : index
    %c0_6 = arith.constant 0 : index
    %5 = vector.load %arg1[%c1, %c0_5, %c0_6] : memref<2x4x256xf32, #tpu.memory_space<vmem>>, vector<1x4x256xf32>
    %6 = vector.shape_cast %5 : vector<1x4x256xf32> to vector<4x256xf32>
    %c0_7 = arith.constant 0 : index
    %c512 = arith.constant 512 : index
    %7 = vector.load %arg6[%c0_7, %c512] : memref<8x896xf32, #tpu.memory_space<vmem>>, vector<4x256xf32>
    tpu.vector_store %arg6[%c0_7, %c512], %6 {strides = array<i32>} : memref<8x896xf32, #tpu.memory_space<vmem>>, vector<4x256xf32>,
    %c0_8 = arith.constant 0 : index
    %c111 = arith.constant 111 : index
    %8 = vector.load %arg6[%c0_8, %c111] : memref<8x896xf32, #tpu.memory_space<vmem>>, vector<8x256xf32>
    %c0_9 = arith.constant 0 : index
    %c0_10 = arith.constant 0 : index
    %9 = vector.load %arg4[%c0_9, %c0_10] : memref<8x256xf32, #tpu.memory_space<vmem>>, vector<1x256xf32>
    %10 = vector.broadcast %9 : vector<1x256xf32> to vector<8x256xf32>
    %11 = arith.mulf %8, %10 : vector<8x256xf32>
    %c0_11 = arith.constant 0 : index
    %c0_12 = arith.constant 0 : index
    %12 = vector.load %arg7[%c0_11, %c0_12] : memref<72x512xf32, #tpu.memory_space<vmem>>, vector<8x256xf32>
    tpu.vector_store %arg7[%c0_11, %c0_12], %11 {strides = array<i32>} : memref<72x512xf32, #tpu.memory_space<vmem>>, vector<8x256xf32>,
    %c0_13 = arith.constant 0 : index
    %c495 = arith.constant 495 : index
    %13 = vector.load %arg6[%c0_13, %c495] : memref<8x896xf32, #tpu.memory_space<vmem>>, vector<8x256xf32>
    %c0_14 = arith.constant 0 : index
    %c0_15 = arith.constant 0 : index
    %14 = vector.load %arg4[%c0_14, %c0_15] : memref<8x256xf32, #tpu.memory_space<vmem>>, vector<1x256xf32>
    %15 = vector.broadcast %14 : vector<1x256xf32> to vector<8x256xf32>
    %16 = arith.mulf %13, %15 : vector<8x256xf32>
    %c0_16 = arith.constant 0 : index
    %c256 = arith.constant 256 : index
    %17 = vector.load %arg7[%c0_16, %c256] : memref<72x512xf32, #tpu.memory_space<vmem>>, vector<8x256xf32>
    tpu.vector_store %arg7[%c0_16, %c256], %16 {strides = array<i32>} : memref<72x512xf32, #tpu.memory_space<vmem>>, vector<8x256xf32>,
    %c0_17 = arith.constant 0 : index
    %c112 = arith.constant 112 : index
    %18 = vector.load %arg6[%c0_17, %c112] : memref<8x896xf32, #tpu.memory_space<vmem>>, vector<8x256xf32>
    %c8 = arith.constant 8 : index
    %c0_18 = arith.constant 0 : index
    %19 = vector.load %arg7[%c8, %c0_18] : memref<72x512xf32, #tpu.memory_space<vmem>>, vector<8x256xf32>
    tpu.vector_store %arg7[%c8, %c0_18], %18 {strides = array<i32>} : memref<72x512xf32, #tpu.memory_space<vmem>>, vector<8x256xf32>,
    %c0_19 = arith.constant 0 : index
    %c496 = arith.constant 496 : index
    %20 = vector.load %arg6[%c0_19, %c496] : memref<8x896xf32, #tpu.memory_space<vmem>>, vector<8x256xf32>
    %c8_20 = arith.constant 8 : index
    %c256_21 = arith.constant 256 : index
    %21 = vector.load %arg7[%c8_20, %c256_21] : memref<72x512xf32, #tpu.memory_space<vmem>>, vector<8x256xf32>
    tpu.vector_store %arg7[%c8_20, %c256_21], %20 {strides = array<i32>} : memref<72x512xf32, #tpu.memory_space<vmem>>, vector<8x256xf32>,
    %c0_22 = arith.constant 0 : index
    %c113 = arith.constant 113 : index
    %22 = vector.load %arg6[%c0_22, %c113] : memref<8x896xf32, #tpu.memory_space<vmem>>, vector<8x256xf32>
    %c2 = arith.constant 2 : index
    %c0_23 = arith.constant 0 : index
    %23 = vector.load %arg4[%c2, %c0_23] : memref<8x256xf32, #tpu.memory_space<vmem>>, vector<1x256xf32>
    %24 = vector.broadcast %23 : vector<1x256xf32> to vector<8x256xf32>
    %25 = arith.mulf %22, %24 : vector<8x256xf32>
    %c16 = arith.constant 16 : index
    %c0_24 = arith.constant 0 : index
    %26 = vector.load %arg7[%c16, %c0_24] : memref<72x512xf32, #tpu.memory_space<vmem>>, vector<8x256xf32>
    tpu.vector_store %arg7[%c16, %c0_24], %25 {strides = array<i32>} : memref<72x512xf32, #tpu.memory_space<vmem>>, vector<8x256xf32>,
    %c0_25 = arith.constant 0 : index
    %c497 = arith.constant 497 : index
    %27 = vector.load %arg6[%c0_25, %c497] : memref<8x896xf32, #tpu.memory_space<vmem>>, vector<8x256xf32>
    %c2_26 = arith.constant 2 : index
    %c0_27 = arith.constant 0 : index
    %28 = vector.load %arg4[%c2_26, %c0_27] : memref<8x256xf32, #tpu.memory_space<vmem>>, vector<1x256xf32>
    %29 = vector.broadcast %28 : vector<1x256xf32> to vector<8x256xf32>
    %30 = arith.mulf %27, %29 : vector<8x256xf32>
    %c16_28 = arith.constant 16 : index
    %c256_29 = arith.constant 256 : index
    %31 = vector.load %arg7[%c16_28, %c256_29] : memref<72x512xf32, #tpu.memory_space<vmem>>, vector<8x256xf32>
    tpu.vector_store %arg7[%c16_28, %c256_29], %30 {strides = array<i32>} : memref<72x512xf32, #tpu.memory_space<vmem>>, vector<8x256xf32>,
    %c0_30 = arith.constant 0 : index
    %c127 = arith.constant 127 : index
    %32 = vector.load %arg6[%c0_30, %c127] : memref<8x896xf32, #tpu.memory_space<vmem>>, vector<8x256xf32>
    %c0_31 = arith.constant 0 : index
    %c0_32 = arith.constant 0 : index
    %33 = vector.load %arg4[%c0_31, %c0_32] : memref<8x256xf32, #tpu.memory_space<vmem>>, vector<1x256xf32>
    %34 = vector.broadcast %33 : vector<1x256xf32> to vector<8x256xf32>
    %35 = arith.mulf %32, %34 : vector<8x256xf32>
    %c24 = arith.constant 24 : index
    %c0_33 = arith.constant 0 : index
    %36 = vector.load %arg7[%c24, %c0_33] : memref<72x512xf32, #tpu.memory_space<vmem>>, vector<8x256xf32>
    tpu.vector_store %arg7[%c24, %c0_33], %35 {strides = array<i32>} : memref<72x512xf32, #tpu.memory_space<vmem>>, vector<8x256xf32>,
    %c0_34 = arith.constant 0 : index
    %c511 = arith.constant 511 : index
    %37 = vector.load %arg6[%c0_34, %c511] : memref<8x896xf32, #tpu.memory_space<vmem>>, vector<8x256xf32>
    %c0_35 = arith.constant 0 : index
    %c0_36 = arith.constant 0 : index
    %38 = vector.load %arg4[%c0_35, %c0_36] : memref<8x256xf32, #tpu.memory_space<vmem>>, vector<1x256xf32>
    %39 = vector.broadcast %38 : vector<1x256xf32> to vector<8x256xf32>
    %40 = arith.mulf %37, %39 : vector<8x256xf32>
    %c24_37 = arith.constant 24 : index
    %c256_38 = arith.constant 256 : index
    %41 = vector.load %arg7[%c24_37, %c256_38] : memref<72x512xf32, #tpu.memory_space<vmem>>, vector<8x256xf32>
    tpu.vector_store %arg7[%c24_37, %c256_38], %40 {strides = array<i32>} : memref<72x512xf32, #tpu.memory_space<vmem>>, vector<8x256xf32>,
    %c0_39 = arith.constant 0 : index
    %c128_40 = arith.constant 128 : index
    %42 = vector.load %arg6[%c0_39, %c128_40] : memref<8x896xf32, #tpu.memory_space<vmem>>, vector<8x256xf32>
    %c32 = arith.constant 32 : index
    %c0_41 = arith.constant 0 : index
    %43 = vector.load %arg7[%c32, %c0_41] : memref<72x512xf32, #tpu.memory_space<vmem>>, vector<8x256xf32>
    tpu.vector_store %arg7[%c32, %c0_41], %42 {strides = array<i32>} : memref<72x512xf32, #tpu.memory_space<vmem>>, vector<8x256xf32>,
    %c0_42 = arith.constant 0 : index
    %c512_43 = arith.constant 512 : index
    %44 = vector.load %arg6[%c0_42, %c512_43] : memref<8x896xf32, #tpu.memory_space<vmem>>, vector<8x256xf32>
    %c32_44 = arith.constant 32 : index
    %c256_45 = arith.constant 256 : index
    %45 = vector.load %arg7[%c32_44, %c256_45] : memref<72x512xf32, #tpu.memory_space<vmem>>, vector<8x256xf32>
    tpu.vector_store %arg7[%c32_44, %c256_45], %44 {strides = array<i32>} : memref<72x512xf32, #tpu.memory_space<vmem>>, vector<8x256xf32>,
    %c0_46 = arith.constant 0 : index
    %c129 = arith.constant 129 : index
    %46 = vector.load %arg6[%c0_46, %c129] : memref<8x896xf32, #tpu.memory_space<vmem>>, vector<8x256xf32>
    %c2_47 = arith.constant 2 : index
    %c0_48 = arith.constant 0 : index
    %47 = vector.load %arg4[%c2_47, %c0_48] : memref<8x256xf32, #tpu.memory_space<vmem>>, vector<1x256xf32>
    %48 = vector.broadcast %47 : vector<1x256xf32> to vector<8x256xf32>
    %49 = arith.mulf %46, %48 : vector<8x256xf32>
    %c40 = arith.constant 40 : index
    %c0_49 = arith.constant 0 : index
    %50 = vector.load %arg7[%c40, %c0_49] : memref<72x512xf32, #tpu.memory_space<vmem>>, vector<8x256xf32>
    tpu.vector_store %arg7[%c40, %c0_49], %49 {strides = array<i32>} : memref<72x512xf32, #tpu.memory_space<vmem>>, vector<8x256xf32>,
    %c0_50 = arith.constant 0 : index
    %c513 = arith.constant 513 : index
    %51 = vector.load %arg6[%c0_50, %c513] : memref<8x896xf32, #tpu.memory_space<vmem>>, vector<8x256xf32>
    %c2_51 = arith.constant 2 : index
    %c0_52 = arith.constant 0 : index
    %52 = vector.load %arg4[%c2_51, %c0_52] : memref<8x256xf32, #tpu.memory_space<vmem>>, vector<1x256xf32>
    %53 = vector.broadcast %52 : vector<1x256xf32> to vector<8x256xf32>
    %54 = arith.mulf %51, %53 : vector<8x256xf32>
    %c40_53 = arith.constant 40 : index
    %c256_54 = arith.constant 256 : index
    %55 = vector.load %arg7[%c40_53, %c256_54] : memref<72x512xf32, #tpu.memory_space<vmem>>, vector<8x256xf32>
    tpu.vector_store %arg7[%c40_53, %c256_54], %54 {strides = array<i32>} : memref<72x512xf32, #tpu.memory_space<vmem>>, vector<8x256xf32>,
    %c0_55 = arith.constant 0 : index
    %c143 = arith.constant 143 : index
    %56 = vector.load %arg6[%c0_55, %c143] : memref<8x896xf32, #tpu.memory_space<vmem>>, vector<8x256xf32>
    %c0_56 = arith.constant 0 : index
    %c0_57 = arith.constant 0 : index
    %57 = vector.load %arg4[%c0_56, %c0_57] : memref<8x256xf32, #tpu.memory_space<vmem>>, vector<1x256xf32>
    %58 = vector.broadcast %57 : vector<1x256xf32> to vector<8x256xf32>
    %59 = arith.mulf %56, %58 : vector<8x256xf32>
    %c48 = arith.constant 48 : index
    %c0_58 = arith.constant 0 : index
    %60 = vector.load %arg7[%c48, %c0_58] : memref<72x512xf32, #tpu.memory_space<vmem>>, vector<8x256xf32>
    tpu.vector_store %arg7[%c48, %c0_58], %59 {strides = array<i32>} : memref<72x512xf32, #tpu.memory_space<vmem>>, vector<8x256xf32>,
    %c0_59 = arith.constant 0 : index
    %c527 = arith.constant 527 : index
    %61 = vector.load %arg6[%c0_59, %c527] : memref<8x896xf32, #tpu.memory_space<vmem>>, vector<8x256xf32>
    %c0_60 = arith.constant 0 : index
    %c0_61 = arith.constant 0 : index
    %62 = vector.load %arg4[%c0_60, %c0_61] : memref<8x256xf32, #tpu.memory_space<vmem>>, vector<1x256xf32>
    %63 = vector.broadcast %62 : vector<1x256xf32> to vector<8x256xf32>
    %64 = arith.mulf %61, %63 : vector<8x256xf32>
    %c48_62 = arith.constant 48 : index
    %c256_63 = arith.constant 256 : index
    %65 = vector.load %arg7[%c48_62, %c256_63] : memref<72x512xf32, #tpu.memory_space<vmem>>, vector<8x256xf32>
    tpu.vector_store %arg7[%c48_62, %c256_63], %64 {strides = array<i32>} : memref<72x512xf32, #tpu.memory_space<vmem>>, vector<8x256xf32>,
    %c0_64 = arith.constant 0 : index
    %c144 = arith.constant 144 : index
    %66 = vector.load %arg6[%c0_64, %c144] : memref<8x896xf32, #tpu.memory_space<vmem>>, vector<8x256xf32>
    %c56 = arith.constant 56 : index
    %c0_65 = arith.constant 0 : index
    %67 = vector.load %arg7[%c56, %c0_65] : memref<72x512xf32, #tpu.memory_space<vmem>>, vector<8x256xf32>
    tpu.vector_store %arg7[%c56, %c0_65], %66 {strides = array<i32>} : memref<72x512xf32, #tpu.memory_space<vmem>>, vector<8x256xf32>,
    %c0_66 = arith.constant 0 : index
    %c528 = arith.constant 528 : index
    %68 = vector.load %arg6[%c0_66, %c528] : memref<8x896xf32, #tpu.memory_space<vmem>>, vector<8x256xf32>
    %c56_67 = arith.constant 56 : index
    %c256_68 = arith.constant 256 : index
    %69 = vector.load %arg7[%c56_67, %c256_68] : memref<72x512xf32, #tpu.memory_space<vmem>>, vector<8x256xf32>
    tpu.vector_store %arg7[%c56_67, %c256_68], %68 {strides = array<i32>} : memref<72x512xf32, #tpu.memory_space<vmem>>, vector<8x256xf32>,
    %c0_69 = arith.constant 0 : index
    %c145 = arith.constant 145 : index
    %70 = vector.load %arg6[%c0_69, %c145] : memref<8x896xf32, #tpu.memory_space<vmem>>, vector<8x256xf32>
    %c2_70 = arith.constant 2 : index
    %c0_71 = arith.constant 0 : index
    %71 = vector.load %arg4[%c2_70, %c0_71] : memref<8x256xf32, #tpu.memory_space<vmem>>, vector<1x256xf32>
    %72 = vector.broadcast %71 : vector<1x256xf32> to vector<8x256xf32>
    %73 = arith.mulf %70, %72 : vector<8x256xf32>
    %c64 = arith.constant 64 : index
    %c0_72 = arith.constant 0 : index
    %74 = vector.load %arg7[%c64, %c0_72] : memref<72x512xf32, #tpu.memory_space<vmem>>, vector<8x256xf32>
    tpu.vector_store %arg7[%c64, %c0_72], %73 {strides = array<i32>} : memref<72x512xf32, #tpu.memory_space<vmem>>, vector<8x256xf32>,
    %c0_73 = arith.constant 0 : index
    %c529 = arith.constant 529 : index
    %75 = vector.load %arg6[%c0_73, %c529] : memref<8x896xf32, #tpu.memory_space<vmem>>, vector<8x256xf32>
    %c2_74 = arith.constant 2 : index
    %c0_75 = arith.constant 0 : index
    %76 = vector.load %arg4[%c2_74, %c0_75] : memref<8x256xf32, #tpu.memory_space<vmem>>, vector<1x256xf32>
    %77 = vector.broadcast %76 : vector<1x256xf32> to vector<8x256xf32>
    %78 = arith.mulf %75, %77 : vector<8x256xf32>
    %c64_76 = arith.constant 64 : index
    %c256_77 = arith.constant 256 : index
    %79 = vector.load %arg7[%c64_76, %c256_77] : memref<72x512xf32, #tpu.memory_space<vmem>>, vector<8x256xf32>
    tpu.vector_store %arg7[%c64_76, %c256_77], %78 {strides = array<i32>} : memref<72x512xf32, #tpu.memory_space<vmem>>, vector<8x256xf32>,
    %c0_78 = arith.constant 0 : index
    %c0_79 = arith.constant 0 : index
    %80 = vector.load %arg2[%c0_78, %c0_79] : memref<32x128xf32, #tpu.memory_space<vmem>>, vector<8x72xf32>
    %c0_80 = arith.constant 0 : index
    %c0_81 = arith.constant 0 : index
    %81 = vector.load %arg7[%c0_80, %c0_81] : memref<72x512xf32, #tpu.memory_space<vmem>>, vector<72x512xf32>
    %cst_82 = arith.constant dense<0.000000e+00> : vector<8x512xf32>
    %82 = tpu.matmul %80, %81, %cst_82 {dimension_numbers = #tpu.dot_dimension_numbers<[1], [0], [0], [1], [0, 0, 1, 1], [], []>} : vector<8x72xf32>, vector<72x512xf32>, vector<8x512xf32> -> vector<8x512xf32>
    %c0_83 = arith.constant 0 : index
    %c0_84 = arith.constant 0 : index
    %83 = vector.load %arg3[%c0_83, %c0_84] : memref<32x1xf32, #tpu.memory_space<vmem>>, vector<8x1xf32>
    %84 = vector.broadcast %83 : vector<8x1xf32> to vector<8x512xf32>
    %85 = arith.addf %82, %84 : vector<8x512xf32>
    %cst_85 = arith.constant 0.000000e+00 : f32
    %86 = vector.broadcast %cst_85 : f32 to vector<8x512xf32>
    %87 = arith.cmpf oge, %85, %86 : vector<8x512xf32>
    %cst_86 = arith.constant 0.00999999977 : f32
    %88 = vector.broadcast %cst_86 : f32 to vector<8x512xf32>
    %89 = arith.mulf %88, %85 : vector<8x512xf32>
    %90 = arith.select %87, %85, %89 : vector<8x512xi1>, vector<8x512xf32>
    %91 = vector.extract_strided_slice %90 {offsets = [0, 0], sizes = [8, 256], strides = [1, 1]} : vector<8x512xf32> to vector<8x256xf32>
    %c0_87 = arith.constant 0 : index
    %c128_88 = arith.constant 128 : index
    %92 = vector.load %arg6[%c0_87, %c128_88] : memref<8x896xf32, #tpu.memory_space<vmem>>, vector<8x256xf32>
    tpu.vector_store %arg6[%c0_87, %c128_88], %91 {strides = array<i32>} : memref<8x896xf32, #tpu.memory_space<vmem>>, vector<8x256xf32>,
    %93 = vector.extract_strided_slice %90 {offsets = [0, 256], sizes = [8, 256], strides = [1, 1]} : vector<8x512xf32> to vector<8x256xf32>
    %c0_89 = arith.constant 0 : index
    %c512_90 = arith.constant 512 : index
    %94 = vector.load %arg6[%c0_89, %c512_90] : memref<8x896xf32, #tpu.memory_space<vmem>>, vector<8x256xf32>
    tpu.vector_store %arg6[%c0_89, %c512_90], %93 {strides = array<i32>} : memref<8x896xf32, #tpu.memory_space<vmem>>, vector<8x256xf32>,
    %c0_91 = arith.constant 0 : index
    %c111_92 = arith.constant 111 : index
    %95 = vector.load %arg6[%c0_91, %c111_92] : memref<8x896xf32, #tpu.memory_space<vmem>>, vector<8x256xf32>
    %c0_93 = arith.constant 0 : index
    %c0_94 = arith.constant 0 : index
    %96 = vector.load %arg4[%c0_93, %c0_94] : memref<8x256xf32, #tpu.memory_space<vmem>>, vector<1x256xf32>
    %97 = vector.broadcast %96 : vector<1x256xf32> to vector<8x256xf32>
    %98 = arith.mulf %95, %97 : vector<8x256xf32>
    %c0_95 = arith.constant 0 : index
    %c0_96 = arith.constant 0 : index
    %99 = vector.load %arg7[%c0_95, %c0_96] : memref<72x512xf32, #tpu.memory_space<vmem>>, vector<8x256xf32>
    tpu.vector_store %arg7[%c0_95, %c0_96], %98 {strides = array<i32>} : memref<72x512xf32, #tpu.memory_space<vmem>>, vector<8x256xf32>,
    %c0_97 = arith.constant 0 : index
    %c495_98 = arith.constant 495 : index
    %100 = vector.load %arg6[%c0_97, %c495_98] : memref<8x896xf32, #tpu.memory_space<vmem>>, vector<8x256xf32>
    %c0_99 = arith.constant 0 : index
    %c0_100 = arith.constant 0 : index
    %101 = vector.load %arg4[%c0_99, %c0_100] : memref<8x256xf32, #tpu.memory_space<vmem>>, vector<1x256xf32>
    %102 = vector.broadcast %101 : vector<1x256xf32> to vector<8x256xf32>
    %103 = arith.mulf %100, %102 : vector<8x256xf32>
    %c0_101 = arith.constant 0 : index
    %c256_102 = arith.constant 256 : index
    %104 = vector.load %arg7[%c0_101, %c256_102] : memref<72x512xf32, #tpu.memory_space<vmem>>, vector<8x256xf32>
    tpu.vector_store %arg7[%c0_101, %c256_102], %103 {strides = array<i32>} : memref<72x512xf32, #tpu.memory_space<vmem>>, vector<8x256xf32>,
    %c0_103 = arith.constant 0 : index
    %c112_104 = arith.constant 112 : index
    %105 = vector.load %arg6[%c0_103, %c112_104] : memref<8x896xf32, #tpu.memory_space<vmem>>, vector<8x256xf32>
    %c8_105 = arith.constant 8 : index
    %c0_106 = arith.constant 0 : index
    %106 = vector.load %arg7[%c8_105, %c0_106] : memref<72x512xf32, #tpu.memory_space<vmem>>, vector<8x256xf32>
    tpu.vector_store %arg7[%c8_105, %c0_106], %105 {strides = array<i32>} : memref<72x512xf32, #tpu.memory_space<vmem>>, vector<8x256xf32>,
    %c0_107 = arith.constant 0 : index
    %c496_108 = arith.constant 496 : index
    %107 = vector.load %arg6[%c0_107, %c496_108] : memref<8x896xf32, #tpu.memory_space<vmem>>, vector<8x256xf32>
    %c8_109 = arith.constant 8 : index
    %c256_110 = arith.constant 256 : index
    %108 = vector.load %arg7[%c8_109, %c256_110] : memref<72x512xf32, #tpu.memory_space<vmem>>, vector<8x256xf32>
    tpu.vector_store %arg7[%c8_109, %c256_110], %107 {strides = array<i32>} : memref<72x512xf32, #tpu.memory_space<vmem>>, vector<8x256xf32>,
    %c0_111 = arith.constant 0 : index
    %c113_112 = arith.constant 113 : index
    %109 = vector.load %arg6[%c0_111, %c113_112] : memref<8x896xf32, #tpu.memory_space<vmem>>, vector<8x256xf32>
    %c2_113 = arith.constant 2 : index
    %c0_114 = arith.constant 0 : index
    %110 = vector.load %arg4[%c2_113, %c0_114] : memref<8x256xf32, #tpu.memory_space<vmem>>, vector<1x256xf32>
    %111 = vector.broadcast %110 : vector<1x256xf32> to vector<8x256xf32>
    %112 = arith.mulf %109, %111 : vector<8x256xf32>
    %c16_115 = arith.constant 16 : index
    %c0_116 = arith.constant 0 : index
    %113 = vector.load %arg7[%c16_115, %c0_116] : memref<72x512xf32, #tpu.memory_space<vmem>>, vector<8x256xf32>
    tpu.vector_store %arg7[%c16_115, %c0_116], %112 {strides = array<i32>} : memref<72x512xf32, #tpu.memory_space<vmem>>, vector<8x256xf32>,
    %c0_117 = arith.constant 0 : index
    %c497_118 = arith.constant 497 : index
    %114 = vector.load %arg6[%c0_117, %c497_118] : memref<8x896xf32, #tpu.memory_space<vmem>>, vector<8x256xf32>
    %c2_119 = arith.constant 2 : index
    %c0_120 = arith.constant 0 : index
    %115 = vector.load %arg4[%c2_119, %c0_120] : memref<8x256xf32, #tpu.memory_space<vmem>>, vector<1x256xf32>
    %116 = vector.broadcast %115 : vector<1x256xf32> to vector<8x256xf32>
    %117 = arith.mulf %114, %116 : vector<8x256xf32>
    %c16_121 = arith.constant 16 : index
    %c256_122 = arith.constant 256 : index
    %118 = vector.load %arg7[%c16_121, %c256_122] : memref<72x512xf32, #tpu.memory_space<vmem>>, vector<8x256xf32>
    tpu.vector_store %arg7[%c16_121, %c256_122], %117 {strides = array<i32>} : memref<72x512xf32, #tpu.memory_space<vmem>>, vector<8x256xf32>,
    %c0_123 = arith.constant 0 : index
    %c127_124 = arith.constant 127 : index
    %119 = vector.load %arg6[%c0_123, %c127_124] : memref<8x896xf32, #tpu.memory_space<vmem>>, vector<8x256xf32>
    %c0_125 = arith.constant 0 : index
    %c0_126 = arith.constant 0 : index
    %120 = vector.load %arg4[%c0_125, %c0_126] : memref<8x256xf32, #tpu.memory_space<vmem>>, vector<1x256xf32>
    %121 = vector.broadcast %120 : vector<1x256xf32> to vector<8x256xf32>
    %122 = arith.mulf %119, %121 : vector<8x256xf32>
    %c24_127 = arith.constant 24 : index
    %c0_128 = arith.constant 0 : index
    %123 = vector.load %arg7[%c24_127, %c0_128] : memref<72x512xf32, #tpu.memory_space<vmem>>, vector<8x256xf32>
    tpu.vector_store %arg7[%c24_127, %c0_128], %122 {strides = array<i32>} : memref<72x512xf32, #tpu.memory_space<vmem>>, vector<8x256xf32>,
    %c0_129 = arith.constant 0 : index
    %c511_130 = arith.constant 511 : index
    %124 = vector.load %arg6[%c0_129, %c511_130] : memref<8x896xf32, #tpu.memory_space<vmem>>, vector<8x256xf32>
    %c0_131 = arith.constant 0 : index
    %c0_132 = arith.constant 0 : index
    %125 = vector.load %arg4[%c0_131, %c0_132] : memref<8x256xf32, #tpu.memory_space<vmem>>, vector<1x256xf32>
    %126 = vector.broadcast %125 : vector<1x256xf32> to vector<8x256xf32>
    %127 = arith.mulf %124, %126 : vector<8x256xf32>
    %c24_133 = arith.constant 24 : index
    %c256_134 = arith.constant 256 : index
    %128 = vector.load %arg7[%c24_133, %c256_134] : memref<72x512xf32, #tpu.memory_space<vmem>>, vector<8x256xf32>
    tpu.vector_store %arg7[%c24_133, %c256_134], %127 {strides = array<i32>} : memref<72x512xf32, #tpu.memory_space<vmem>>, vector<8x256xf32>,
    %c0_135 = arith.constant 0 : index
    %c128_136 = arith.constant 128 : index
    %129 = vector.load %arg6[%c0_135, %c128_136] : memref<8x896xf32, #tpu.memory_space<vmem>>, vector<8x256xf32>
    %c32_137 = arith.constant 32 : index
    %c0_138 = arith.constant 0 : index
    %130 = vector.load %arg7[%c32_137, %c0_138] : memref<72x512xf32, #tpu.memory_space<vmem>>, vector<8x256xf32>
    tpu.vector_store %arg7[%c32_137, %c0_138], %129 {strides = array<i32>} : memref<72x512xf32, #tpu.memory_space<vmem>>, vector<8x256xf32>,
    %c0_139 = arith.constant 0 : index
    %c512_140 = arith.constant 512 : index
    %131 = vector.load %arg6[%c0_139, %c512_140] : memref<8x896xf32, #tpu.memory_space<vmem>>, vector<8x256xf32>
    %c32_141 = arith.constant 32 : index
    %c256_142 = arith.constant 256 : index
    %132 = vector.load %arg7[%c32_141, %c256_142] : memref<72x512xf32, #tpu.memory_space<vmem>>, vector<8x256xf32>
    tpu.vector_store %arg7[%c32_141, %c256_142], %131 {strides = array<i32>} : memref<72x512xf32, #tpu.memory_space<vmem>>, vector<8x256xf32>,
    %c0_143 = arith.constant 0 : index
    %c129_144 = arith.constant 129 : index
    %133 = vector.load %arg6[%c0_143, %c129_144] : memref<8x896xf32, #tpu.memory_space<vmem>>, vector<8x256xf32>
    %c2_145 = arith.constant 2 : index
    %c0_146 = arith.constant 0 : index
    %134 = vector.load %arg4[%c2_145, %c0_146] : memref<8x256xf32, #tpu.memory_space<vmem>>, vector<1x256xf32>
    %135 = vector.broadcast %134 : vector<1x256xf32> to vector<8x256xf32>
    %136 = arith.mulf %133, %135 : vector<8x256xf32>
    %c40_147 = arith.constant 40 : index
    %c0_148 = arith.constant 0 : index
    %137 = vector.load %arg7[%c40_147, %c0_148] : memref<72x512xf32, #tpu.memory_space<vmem>>, vector<8x256xf32>
    tpu.vector_store %arg7[%c40_147, %c0_148], %136 {strides = array<i32>} : memref<72x512xf32, #tpu.memory_space<vmem>>, vector<8x256xf32>,
    %c0_149 = arith.constant 0 : index
    %c513_150 = arith.constant 513 : index
    %138 = vector.load %arg6[%c0_149, %c513_150] : memref<8x896xf32, #tpu.memory_space<vmem>>, vector<8x256xf32>
    %c2_151 = arith.constant 2 : index
    %c0_152 = arith.constant 0 : index
    %139 = vector.load %arg4[%c2_151, %c0_152] : memref<8x256xf32, #tpu.memory_space<vmem>>, vector<1x256xf32>
    %140 = vector.broadcast %139 : vector<1x256xf32> to vector<8x256xf32>
    %141 = arith.mulf %138, %140 : vector<8x256xf32>
    %c40_153 = arith.constant 40 : index
    %c256_154 = arith.constant 256 : index
    %142 = vector.load %arg7[%c40_153, %c256_154] : memref<72x512xf32, #tpu.memory_space<vmem>>, vector<8x256xf32>
    tpu.vector_store %arg7[%c40_153, %c256_154], %141 {strides = array<i32>} : memref<72x512xf32, #tpu.memory_space<vmem>>, vector<8x256xf32>,
    %c0_155 = arith.constant 0 : index
    %c143_156 = arith.constant 143 : index
    %143 = vector.load %arg6[%c0_155, %c143_156] : memref<8x896xf32, #tpu.memory_space<vmem>>, vector<8x256xf32>
    %c0_157 = arith.constant 0 : index
    %c0_158 = arith.constant 0 : index
    %144 = vector.load %arg4[%c0_157, %c0_158] : memref<8x256xf32, #tpu.memory_space<vmem>>, vector<1x256xf32>
    %145 = vector.broadcast %144 : vector<1x256xf32> to vector<8x256xf32>
    %146 = arith.mulf %143, %145 : vector<8x256xf32>
    %c48_159 = arith.constant 48 : index
    %c0_160 = arith.constant 0 : index
    %147 = vector.load %arg7[%c48_159, %c0_160] : memref<72x512xf32, #tpu.memory_space<vmem>>, vector<8x256xf32>
    tpu.vector_store %arg7[%c48_159, %c0_160], %146 {strides = array<i32>} : memref<72x512xf32, #tpu.memory_space<vmem>>, vector<8x256xf32>,
    %c0_161 = arith.constant 0 : index
    %c527_162 = arith.constant 527 : index
    %148 = vector.load %arg6[%c0_161, %c527_162] : memref<8x896xf32, #tpu.memory_space<vmem>>, vector<8x256xf32>
    %c0_163 = arith.constant 0 : index
    %c0_164 = arith.constant 0 : index
    %149 = vector.load %arg4[%c0_163, %c0_164] : memref<8x256xf32, #tpu.memory_space<vmem>>, vector<1x256xf32>
    %150 = vector.broadcast %149 : vector<1x256xf32> to vector<8x256xf32>
    %151 = arith.mulf %148, %150 : vector<8x256xf32>
    %c48_165 = arith.constant 48 : index
    %c256_166 = arith.constant 256 : index
    %152 = vector.load %arg7[%c48_165, %c256_166] : memref<72x512xf32, #tpu.memory_space<vmem>>, vector<8x256xf32>
    tpu.vector_store %arg7[%c48_165, %c256_166], %151 {strides = array<i32>} : memref<72x512xf32, #tpu.memory_space<vmem>>, vector<8x256xf32>,
    %c0_167 = arith.constant 0 : index
    %c144_168 = arith.constant 144 : index
    %153 = vector.load %arg6[%c0_167, %c144_168] : memref<8x896xf32, #tpu.memory_space<vmem>>, vector<8x256xf32>
    %c56_169 = arith.constant 56 : index
    %c0_170 = arith.constant 0 : index
    %154 = vector.load %arg7[%c56_169, %c0_170] : memref<72x512xf32, #tpu.memory_space<vmem>>, vector<8x256xf32>
    tpu.vector_store %arg7[%c56_169, %c0_170], %153 {strides = array<i32>} : memref<72x512xf32, #tpu.memory_space<vmem>>, vector<8x256xf32>,
    %c0_171 = arith.constant 0 : index
    %c528_172 = arith.constant 528 : index
    %155 = vector.load %arg6[%c0_171, %c528_172] : memref<8x896xf32, #tpu.memory_space<vmem>>, vector<8x256xf32>
    %c56_173 = arith.constant 56 : index
    %c256_174 = arith.constant 256 : index
    %156 = vector.load %arg7[%c56_173, %c256_174] : memref<72x512xf32, #tpu.memory_space<vmem>>, vector<8x256xf32>
    tpu.vector_store %arg7[%c56_173, %c256_174], %155 {strides = array<i32>} : memref<72x512xf32, #tpu.memory_space<vmem>>, vector<8x256xf32>,
    %c0_175 = arith.constant 0 : index
    %c145_176 = arith.constant 145 : index
    %157 = vector.load %arg6[%c0_175, %c145_176] : memref<8x896xf32, #tpu.memory_space<vmem>>, vector<8x256xf32>
    %c2_177 = arith.constant 2 : index
    %c0_178 = arith.constant 0 : index
    %158 = vector.load %arg4[%c2_177, %c0_178] : memref<8x256xf32, #tpu.memory_space<vmem>>, vector<1x256xf32>
    %159 = vector.broadcast %158 : vector<1x256xf32> to vector<8x256xf32>
    %160 = arith.mulf %157, %159 : vector<8x256xf32>
    %c64_179 = arith.constant 64 : index
    %c0_180 = arith.constant 0 : index
    %161 = vector.load %arg7[%c64_179, %c0_180] : memref<72x512xf32, #tpu.memory_space<vmem>>, vector<8x256xf32>
    tpu.vector_store %arg7[%c64_179, %c0_180], %160 {strides = array<i32>} : memref<72x512xf32, #tpu.memory_space<vmem>>, vector<8x256xf32>,
    %c0_181 = arith.constant 0 : index
    %c529_182 = arith.constant 529 : index
    %162 = vector.load %arg6[%c0_181, %c529_182] : memref<8x896xf32, #tpu.memory_space<vmem>>, vector<8x256xf32>
    %c2_183 = arith.constant 2 : index
    %c0_184 = arith.constant 0 : index
    %163 = vector.load %arg4[%c2_183, %c0_184] : memref<8x256xf32, #tpu.memory_space<vmem>>, vector<1x256xf32>
    %164 = vector.broadcast %163 : vector<1x256xf32> to vector<8x256xf32>
    %165 = arith.mulf %162, %164 : vector<8x256xf32>
    %c64_185 = arith.constant 64 : index
    %c256_186 = arith.constant 256 : index
    %166 = vector.load %arg7[%c64_185, %c256_186] : memref<72x512xf32, #tpu.memory_space<vmem>>, vector<8x256xf32>
    tpu.vector_store %arg7[%c64_185, %c256_186], %165 {strides = array<i32>} : memref<72x512xf32, #tpu.memory_space<vmem>>, vector<8x256xf32>,
    %c8_187 = arith.constant 8 : index
    %c0_188 = arith.constant 0 : index
    %167 = vector.load %arg2[%c8_187, %c0_188] : memref<32x128xf32, #tpu.memory_space<vmem>>, vector<8x72xf32>
    %c0_189 = arith.constant 0 : index
    %c0_190 = arith.constant 0 : index
    %168 = vector.load %arg7[%c0_189, %c0_190] : memref<72x512xf32, #tpu.memory_space<vmem>>, vector<72x512xf32>
    %cst_191 = arith.constant dense<0.000000e+00> : vector<8x512xf32>
    %169 = tpu.matmul %167, %168, %cst_191 {dimension_numbers = #tpu.dot_dimension_numbers<[1], [0], [0], [1], [0, 0, 1, 1], [], []>} : vector<8x72xf32>, vector<72x512xf32>, vector<8x512xf32> -> vector<8x512xf32>
    %c8_192 = arith.constant 8 : index
    %c0_193 = arith.constant 0 : index
    %170 = vector.load %arg3[%c8_192, %c0_193] : memref<32x1xf32, #tpu.memory_space<vmem>>, vector<8x1xf32>
    %171 = vector.broadcast %170 : vector<8x1xf32> to vector<8x512xf32>
    %172 = arith.addf %169, %171 : vector<8x512xf32>
    %cst_194 = arith.constant 0.000000e+00 : f32
    %173 = vector.broadcast %cst_194 : f32 to vector<8x512xf32>
    %174 = arith.cmpf oge, %172, %173 : vector<8x512xf32>
    %cst_195 = arith.constant 0.00999999977 : f32
    %175 = vector.broadcast %cst_195 : f32 to vector<8x512xf32>
    %176 = arith.mulf %175, %172 : vector<8x512xf32>
    %177 = arith.select %174, %172, %176 : vector<8x512xi1>, vector<8x512xf32>
    %c20 = arith.constant 20 : index
    %c0_196 = arith.constant 0 : index
    %178 = vector.load %arg2[%c20, %c0_196] : memref<32x128xf32, #tpu.memory_space<vmem>>, vector<8x8xf32>
    %cst_197 = arith.constant dense<0.000000e+00> : vector<8x512xf32>
    %179 = tpu.matmul %178, %177, %cst_197 {dimension_numbers = #tpu.dot_dimension_numbers<[1], [0], [0], [1], [0, 0, 1, 1], [], []>} : vector<8x8xf32>, vector<8x512xf32>, vector<8x512xf32> -> vector<8x512xf32>
    %c20_198 = arith.constant 20 : index
    %c0_199 = arith.constant 0 : index
    %180 = vector.load %arg3[%c20_198, %c0_199] : memref<32x1xf32, #tpu.memory_space<vmem>>, vector<8x1xf32>
    %181 = vector.broadcast %180 : vector<8x1xf32> to vector<8x512xf32>
    %182 = arith.addf %179, %181 : vector<8x512xf32>
    %cst_200 = arith.constant 0.000000e+00 : f32
    %183 = vector.broadcast %cst_200 : f32 to vector<8x512xf32>
    %184 = arith.cmpf oge, %182, %183 : vector<8x512xf32>
    %cst_201 = arith.constant 0.00999999977 : f32
    %185 = vector.broadcast %cst_201 : f32 to vector<8x512xf32>
    %186 = arith.mulf %185, %182 : vector<8x512xf32>
    %187 = arith.select %184, %182, %186 : vector<8x512xi1>, vector<8x512xf32>
    %188 = vector.extract_strided_slice %187 {offsets = [0, 0], sizes = [4, 256], strides = [1, 1]} : vector<8x512xf32> to vector<4x256xf32>
    %189 = vector.extract_strided_slice %187 {offsets = [4, 0], sizes = [4, 256], strides = [1, 1]} : vector<8x512xf32> to vector<4x256xf32>
    %190 = arith.addf %188, %189 : vector<4x256xf32>
    %c0_202 = arith.constant 0 : index
    %c0_203 = arith.constant 0 : index
    %c0_204 = arith.constant 0 : index
    %191 = vector.load %arg1[%c0_202, %c0_203, %c0_204] : memref<2x4x256xf32, #tpu.memory_space<vmem>>, vector<1x4x256xf32>
    %192 = vector.shape_cast %191 : vector<1x4x256xf32> to vector<4x256xf32>
    %193 = arith.addf %190, %192 : vector<4x256xf32>
    %c0_205 = arith.constant 0 : index
    %c128_206 = arith.constant 128 : index
    %194 = vector.load %arg6[%c0_205, %c128_206] : memref<8x896xf32, #tpu.memory_space<vmem>>, vector<4x256xf32>
    tpu.vector_store %arg6[%c0_205, %c128_206], %193 {strides = array<i32>} : memref<8x896xf32, #tpu.memory_space<vmem>>, vector<4x256xf32>,
    %195 = vector.extract_strided_slice %187 {offsets = [0, 256], sizes = [4, 256], strides = [1, 1]} : vector<8x512xf32> to vector<4x256xf32>
    %196 = vector.extract_strided_slice %187 {offsets = [4, 256], sizes = [4, 256], strides = [1, 1]} : vector<8x512xf32> to vector<4x256xf32>
    %197 = arith.addf %195, %196 : vector<4x256xf32>
    %c1_207 = arith.constant 1 : index
    %c0_208 = arith.constant 0 : index
    %c0_209 = arith.constant 0 : index
    %198 = vector.load %arg1[%c1_207, %c0_208, %c0_209] : memref<2x4x256xf32, #tpu.memory_space<vmem>>, vector<1x4x256xf32>
    %199 = vector.shape_cast %198 : vector<1x4x256xf32> to vector<4x256xf32>
    %200 = arith.addf %197, %199 : vector<4x256xf32>
    %c0_210 = arith.constant 0 : index
    %c512_211 = arith.constant 512 : index
    %201 = vector.load %arg6[%c0_210, %c512_211] : memref<8x896xf32, #tpu.memory_space<vmem>>, vector<4x256xf32>
    tpu.vector_store %arg6[%c0_210, %c512_211], %200 {strides = array<i32>} : memref<8x896xf32, #tpu.memory_space<vmem>>, vector<4x256xf32>,
    %c0_212 = arith.constant 0 : index
    %c111_213 = arith.constant 111 : index
    %202 = vector.load %arg6[%c0_212, %c111_213] : memref<8x896xf32, #tpu.memory_space<vmem>>, vector<8x256xf32>
    %c0_214 = arith.constant 0 : index
    %c0_215 = arith.constant 0 : index
    %203 = vector.load %arg4[%c0_214, %c0_215] : memref<8x256xf32, #tpu.memory_space<vmem>>, vector<1x256xf32>
    %204 = vector.broadcast %203 : vector<1x256xf32> to vector<8x256xf32>
    %205 = arith.mulf %202, %204 : vector<8x256xf32>
    %c0_216 = arith.constant 0 : index
    %c0_217 = arith.constant 0 : index
    %206 = vector.load %arg7[%c0_216, %c0_217] : memref<72x512xf32, #tpu.memory_space<vmem>>, vector<8x256xf32>
    tpu.vector_store %arg7[%c0_216, %c0_217], %205 {strides = array<i32>} : memref<72x512xf32, #tpu.memory_space<vmem>>, vector<8x256xf32>,
    %c0_218 = arith.constant 0 : index
    %c495_219 = arith.constant 495 : index
    %207 = vector.load %arg6[%c0_218, %c495_219] : memref<8x896xf32, #tpu.memory_space<vmem>>, vector<8x256xf32>
    %c0_220 = arith.constant 0 : index
    %c0_221 = arith.constant 0 : index
    %208 = vector.load %arg4[%c0_220, %c0_221] : memref<8x256xf32, #tpu.memory_space<vmem>>, vector<1x256xf32>
    %209 = vector.broadcast %208 : vector<1x256xf32> to vector<8x256xf32>
    %210 = arith.mulf %207, %209 : vector<8x256xf32>
    %c0_222 = arith.constant 0 : index
    %c256_223 = arith.constant 256 : index
    %211 = vector.load %arg7[%c0_222, %c256_223] : memref<72x512xf32, #tpu.memory_space<vmem>>, vector<8x256xf32>
    tpu.vector_store %arg7[%c0_222, %c256_223], %210 {strides = array<i32>} : memref<72x512xf32, #tpu.memory_space<vmem>>, vector<8x256xf32>,
    %c0_224 = arith.constant 0 : index
    %c112_225 = arith.constant 112 : index
    %212 = vector.load %arg6[%c0_224, %c112_225] : memref<8x896xf32, #tpu.memory_space<vmem>>, vector<8x256xf32>
    %c8_226 = arith.constant 8 : index
    %c0_227 = arith.constant 0 : index
    %213 = vector.load %arg7[%c8_226, %c0_227] : memref<72x512xf32, #tpu.memory_space<vmem>>, vector<8x256xf32>
    tpu.vector_store %arg7[%c8_226, %c0_227], %212 {strides = array<i32>} : memref<72x512xf32, #tpu.memory_space<vmem>>, vector<8x256xf32>,
    %c0_228 = arith.constant 0 : index
    %c496_229 = arith.constant 496 : index
    %214 = vector.load %arg6[%c0_228, %c496_229] : memref<8x896xf32, #tpu.memory_space<vmem>>, vector<8x256xf32>
    %c8_230 = arith.constant 8 : index
    %c256_231 = arith.constant 256 : index
    %215 = vector.load %arg7[%c8_230, %c256_231] : memref<72x512xf32, #tpu.memory_space<vmem>>, vector<8x256xf32>
    tpu.vector_store %arg7[%c8_230, %c256_231], %214 {strides = array<i32>} : memref<72x512xf32, #tpu.memory_space<vmem>>, vector<8x256xf32>,
    %c0_232 = arith.constant 0 : index
    %c113_233 = arith.constant 113 : index
    %216 = vector.load %arg6[%c0_232, %c113_233] : memref<8x896xf32, #tpu.memory_space<vmem>>, vector<8x256xf32>
    %c2_234 = arith.constant 2 : index
    %c0_235 = arith.constant 0 : index
    %217 = vector.load %arg4[%c2_234, %c0_235] : memref<8x256xf32, #tpu.memory_space<vmem>>, vector<1x256xf32>
    %218 = vector.broadcast %217 : vector<1x256xf32> to vector<8x256xf32>
    %219 = arith.mulf %216, %218 : vector<8x256xf32>
    %c16_236 = arith.constant 16 : index
    %c0_237 = arith.constant 0 : index
    %220 = vector.load %arg7[%c16_236, %c0_237] : memref<72x512xf32, #tpu.memory_space<vmem>>, vector<8x256xf32>
    tpu.vector_store %arg7[%c16_236, %c0_237], %219 {strides = array<i32>} : memref<72x512xf32, #tpu.memory_space<vmem>>, vector<8x256xf32>,
    %c0_238 = arith.constant 0 : index
    %c497_239 = arith.constant 497 : index
    %221 = vector.load %arg6[%c0_238, %c497_239] : memref<8x896xf32, #tpu.memory_space<vmem>>, vector<8x256xf32>
    %c2_240 = arith.constant 2 : index
    %c0_241 = arith.constant 0 : index
    %222 = vector.load %arg4[%c2_240, %c0_241] : memref<8x256xf32, #tpu.memory_space<vmem>>, vector<1x256xf32>
    %223 = vector.broadcast %222 : vector<1x256xf32> to vector<8x256xf32>
    %224 = arith.mulf %221, %223 : vector<8x256xf32>
    %c16_242 = arith.constant 16 : index
    %c256_243 = arith.constant 256 : index
    %225 = vector.load %arg7[%c16_242, %c256_243] : memref<72x512xf32, #tpu.memory_space<vmem>>, vector<8x256xf32>
    tpu.vector_store %arg7[%c16_242, %c256_243], %224 {strides = array<i32>} : memref<72x512xf32, #tpu.memory_space<vmem>>, vector<8x256xf32>,
    %c0_244 = arith.constant 0 : index
    %c127_245 = arith.constant 127 : index
    %226 = vector.load %arg6[%c0_244, %c127_245] : memref<8x896xf32, #tpu.memory_space<vmem>>, vector<8x256xf32>
    %c0_246 = arith.constant 0 : index
    %c0_247 = arith.constant 0 : index
    %227 = vector.load %arg4[%c0_246, %c0_247] : memref<8x256xf32, #tpu.memory_space<vmem>>, vector<1x256xf32>
    %228 = vector.broadcast %227 : vector<1x256xf32> to vector<8x256xf32>
    %229 = arith.mulf %226, %228 : vector<8x256xf32>
    %c24_248 = arith.constant 24 : index
    %c0_249 = arith.constant 0 : index
    %230 = vector.load %arg7[%c24_248, %c0_249] : memref<72x512xf32, #tpu.memory_space<vmem>>, vector<8x256xf32>
    tpu.vector_store %arg7[%c24_248, %c0_249], %229 {strides = array<i32>} : memref<72x512xf32, #tpu.memory_space<vmem>>, vector<8x256xf32>,
    %c0_250 = arith.constant 0 : index
    %c511_251 = arith.constant 511 : index
    %231 = vector.load %arg6[%c0_250, %c511_251] : memref<8x896xf32, #tpu.memory_space<vmem>>, vector<8x256xf32>
    %c0_252 = arith.constant 0 : index
    %c0_253 = arith.constant 0 : index
    %232 = vector.load %arg4[%c0_252, %c0_253] : memref<8x256xf32, #tpu.memory_space<vmem>>, vector<1x256xf32>
    %233 = vector.broadcast %232 : vector<1x256xf32> to vector<8x256xf32>
    %234 = arith.mulf %231, %233 : vector<8x256xf32>
    %c24_254 = arith.constant 24 : index
    %c256_255 = arith.constant 256 : index
    %235 = vector.load %arg7[%c24_254, %c256_255] : memref<72x512xf32, #tpu.memory_space<vmem>>, vector<8x256xf32>
    tpu.vector_store %arg7[%c24_254, %c256_255], %234 {strides = array<i32>} : memref<72x512xf32, #tpu.memory_space<vmem>>, vector<8x256xf32>,
    %c0_256 = arith.constant 0 : index
    %c128_257 = arith.constant 128 : index
    %236 = vector.load %arg6[%c0_256, %c128_257] : memref<8x896xf32, #tpu.memory_space<vmem>>, vector<8x256xf32>
    %c32_258 = arith.constant 32 : index
    %c0_259 = arith.constant 0 : index
    %237 = vector.load %arg7[%c32_258, %c0_259] : memref<72x512xf32, #tpu.memory_space<vmem>>, vector<8x256xf32>
    tpu.vector_store %arg7[%c32_258, %c0_259], %236 {strides = array<i32>} : memref<72x512xf32, #tpu.memory_space<vmem>>, vector<8x256xf32>,
    %c0_260 = arith.constant 0 : index
    %c512_261 = arith.constant 512 : index
    %238 = vector.load %arg6[%c0_260, %c512_261] : memref<8x896xf32, #tpu.memory_space<vmem>>, vector<8x256xf32>
    %c32_262 = arith.constant 32 : index
    %c256_263 = arith.constant 256 : index
    %239 = vector.load %arg7[%c32_262, %c256_263] : memref<72x512xf32, #tpu.memory_space<vmem>>, vector<8x256xf32>
    tpu.vector_store %arg7[%c32_262, %c256_263], %238 {strides = array<i32>} : memref<72x512xf32, #tpu.memory_space<vmem>>, vector<8x256xf32>,
    %c0_264 = arith.constant 0 : index
    %c129_265 = arith.constant 129 : index
    %240 = vector.load %arg6[%c0_264, %c129_265] : memref<8x896xf32, #tpu.memory_space<vmem>>, vector<8x256xf32>
    %c2_266 = arith.constant 2 : index
    %c0_267 = arith.constant 0 : index
    %241 = vector.load %arg4[%c2_266, %c0_267] : memref<8x256xf32, #tpu.memory_space<vmem>>, vector<1x256xf32>
    %242 = vector.broadcast %241 : vector<1x256xf32> to vector<8x256xf32>
    %243 = arith.mulf %240, %242 : vector<8x256xf32>
    %c40_268 = arith.constant 40 : index
    %c0_269 = arith.constant 0 : index
    %244 = vector.load %arg7[%c40_268, %c0_269] : memref<72x512xf32, #tpu.memory_space<vmem>>, vector<8x256xf32>
    tpu.vector_store %arg7[%c40_268, %c0_269], %243 {strides = array<i32>} : memref<72x512xf32, #tpu.memory_space<vmem>>, vector<8x256xf32>,
    %c0_270 = arith.constant 0 : index
    %c513_271 = arith.constant 513 : index
    %245 = vector.load %arg6[%c0_270, %c513_271] : memref<8x896xf32, #tpu.memory_space<vmem>>, vector<8x256xf32>
    %c2_272 = arith.constant 2 : index
    %c0_273 = arith.constant 0 : index
    %246 = vector.load %arg4[%c2_272, %c0_273] : memref<8x256xf32, #tpu.memory_space<vmem>>, vector<1x256xf32>
    %247 = vector.broadcast %246 : vector<1x256xf32> to vector<8x256xf32>
    %248 = arith.mulf %245, %247 : vector<8x256xf32>
    %c40_274 = arith.constant 40 : index
    %c256_275 = arith.constant 256 : index
    %249 = vector.load %arg7[%c40_274, %c256_275] : memref<72x512xf32, #tpu.memory_space<vmem>>, vector<8x256xf32>
    tpu.vector_store %arg7[%c40_274, %c256_275], %248 {strides = array<i32>} : memref<72x512xf32, #tpu.memory_space<vmem>>, vector<8x256xf32>,
    %c0_276 = arith.constant 0 : index
    %c143_277 = arith.constant 143 : index
    %250 = vector.load %arg6[%c0_276, %c143_277] : memref<8x896xf32, #tpu.memory_space<vmem>>, vector<8x256xf32>
    %c0_278 = arith.constant 0 : index
    %c0_279 = arith.constant 0 : index
    %251 = vector.load %arg4[%c0_278, %c0_279] : memref<8x256xf32, #tpu.memory_space<vmem>>, vector<1x256xf32>
    %252 = vector.broadcast %251 : vector<1x256xf32> to vector<8x256xf32>
    %253 = arith.mulf %250, %252 : vector<8x256xf32>
    %c48_280 = arith.constant 48 : index
    %c0_281 = arith.constant 0 : index
    %254 = vector.load %arg7[%c48_280, %c0_281] : memref<72x512xf32, #tpu.memory_space<vmem>>, vector<8x256xf32>
    tpu.vector_store %arg7[%c48_280, %c0_281], %253 {strides = array<i32>} : memref<72x512xf32, #tpu.memory_space<vmem>>, vector<8x256xf32>,
    %c0_282 = arith.constant 0 : index
    %c527_283 = arith.constant 527 : index
    %255 = vector.load %arg6[%c0_282, %c527_283] : memref<8x896xf32, #tpu.memory_space<vmem>>, vector<8x256xf32>
    %c0_284 = arith.constant 0 : index
    %c0_285 = arith.constant 0 : index
    %256 = vector.load %arg4[%c0_284, %c0_285] : memref<8x256xf32, #tpu.memory_space<vmem>>, vector<1x256xf32>
    %257 = vector.broadcast %256 : vector<1x256xf32> to vector<8x256xf32>
    %258 = arith.mulf %255, %257 : vector<8x256xf32>
    %c48_286 = arith.constant 48 : index
    %c256_287 = arith.constant 256 : index
    %259 = vector.load %arg7[%c48_286, %c256_287] : memref<72x512xf32, #tpu.memory_space<vmem>>, vector<8x256xf32>
    tpu.vector_store %arg7[%c48_286, %c256_287], %258 {strides = array<i32>} : memref<72x512xf32, #tpu.memory_space<vmem>>, vector<8x256xf32>,
    %c0_288 = arith.constant 0 : index
    %c144_289 = arith.constant 144 : index
    %260 = vector.load %arg6[%c0_288, %c144_289] : memref<8x896xf32, #tpu.memory_space<vmem>>, vector<8x256xf32>
    %c56_290 = arith.constant 56 : index
    %c0_291 = arith.constant 0 : index
    %261 = vector.load %arg7[%c56_290, %c0_291] : memref<72x512xf32, #tpu.memory_space<vmem>>, vector<8x256xf32>
    tpu.vector_store %arg7[%c56_290, %c0_291], %260 {strides = array<i32>} : memref<72x512xf32, #tpu.memory_space<vmem>>, vector<8x256xf32>,
    %c0_292 = arith.constant 0 : index
    %c528_293 = arith.constant 528 : index
    %262 = vector.load %arg6[%c0_292, %c528_293] : memref<8x896xf32, #tpu.memory_space<vmem>>, vector<8x256xf32>
    %c56_294 = arith.constant 56 : index
    %c256_295 = arith.constant 256 : index
    %263 = vector.load %arg7[%c56_294, %c256_295] : memref<72x512xf32, #tpu.memory_space<vmem>>, vector<8x256xf32>
    tpu.vector_store %arg7[%c56_294, %c256_295], %262 {strides = array<i32>} : memref<72x512xf32, #tpu.memory_space<vmem>>, vector<8x256xf32>,
    %c0_296 = arith.constant 0 : index
    %c145_297 = arith.constant 145 : index
    %264 = vector.load %arg6[%c0_296, %c145_297] : memref<8x896xf32, #tpu.memory_space<vmem>>, vector<8x256xf32>
    %c2_298 = arith.constant 2 : index
    %c0_299 = arith.constant 0 : index
    %265 = vector.load %arg4[%c2_298, %c0_299] : memref<8x256xf32, #tpu.memory_space<vmem>>, vector<1x256xf32>
    %266 = vector.broadcast %265 : vector<1x256xf32> to vector<8x256xf32>
    %267 = arith.mulf %264, %266 : vector<8x256xf32>
    %c64_300 = arith.constant 64 : index
    %c0_301 = arith.constant 0 : index
    %268 = vector.load %arg7[%c64_300, %c0_301] : memref<72x512xf32, #tpu.memory_space<vmem>>, vector<8x256xf32>
    tpu.vector_store %arg7[%c64_300, %c0_301], %267 {strides = array<i32>} : memref<72x512xf32, #tpu.memory_space<vmem>>, vector<8x256xf32>,
    %c0_302 = arith.constant 0 : index
    %c529_303 = arith.constant 529 : index
    %269 = vector.load %arg6[%c0_302, %c529_303] : memref<8x896xf32, #tpu.memory_space<vmem>>, vector<8x256xf32>
    %c2_304 = arith.constant 2 : index
    %c0_305 = arith.constant 0 : index
    %270 = vector.load %arg4[%c2_304, %c0_305] : memref<8x256xf32, #tpu.memory_space<vmem>>, vector<1x256xf32>
    %271 = vector.broadcast %270 : vector<1x256xf32> to vector<8x256xf32>
    %272 = arith.mulf %269, %271 : vector<8x256xf32>
    %c64_306 = arith.constant 64 : index
    %c256_307 = arith.constant 256 : index
    %273 = vector.load %arg7[%c64_306, %c256_307] : memref<72x512xf32, #tpu.memory_space<vmem>>, vector<8x256xf32>
    tpu.vector_store %arg7[%c64_306, %c256_307], %272 {strides = array<i32>} : memref<72x512xf32, #tpu.memory_space<vmem>>, vector<8x256xf32>,
    %c16_308 = arith.constant 16 : index
    %c0_309 = arith.constant 0 : index
    %274 = vector.load %arg2[%c16_308, %c0_309] : memref<32x128xf32, #tpu.memory_space<vmem>>, vector<4x72xf32>
    %c0_310 = arith.constant 0 : index
    %c0_311 = arith.constant 0 : index
    %275 = vector.load %arg7[%c0_310, %c0_311] : memref<72x512xf32, #tpu.memory_space<vmem>>, vector<72x512xf32>
    %cst_312 = arith.constant dense<0.000000e+00> : vector<4x512xf32>
    %276 = tpu.matmul %274, %275, %cst_312 {dimension_numbers = #tpu.dot_dimension_numbers<[1], [0], [0], [1], [0, 0, 1, 1], [], []>} : vector<4x72xf32>, vector<72x512xf32>, vector<4x512xf32> -> vector<4x512xf32>
    %c16_313 = arith.constant 16 : index
    %c0_314 = arith.constant 0 : index
    %277 = vector.load %arg3[%c16_313, %c0_314] : memref<32x1xf32, #tpu.memory_space<vmem>>, vector<4x1xf32>
    %278 = vector.broadcast %277 : vector<4x1xf32> to vector<4x512xf32>
    %279 = arith.addf %276, %278 : vector<4x512xf32>
    %cst_315 = arith.constant 0.000000e+00 : f32
    %280 = vector.broadcast %cst_315 : f32 to vector<4x512xf32>
    %281 = arith.cmpf oge, %279, %280 : vector<4x512xf32>
    %cst_316 = arith.constant 0.00999999977 : f32
    %282 = vector.broadcast %cst_316 : f32 to vector<4x512xf32>
    %283 = arith.mulf %282, %279 : vector<4x512xf32>
    %284 = arith.select %281, %279, %283 : vector<4x512xi1>, vector<4x512xf32>
    %285 = vector.extract_strided_slice %284 {offsets = [0, 0], sizes = [4, 256], strides = [1, 1]} : vector<4x512xf32> to vector<4x256xf32>
    %c0_317 = arith.constant 0 : index
    %c0_318 = arith.constant 0 : index
    %c0_319 = arith.constant 0 : index
    %286 = vector.load %arg5[%c0_317, %c0_318, %c0_319] : memref<2x4x256xf32, #tpu.memory_space<vmem>>, vector<1x4x256xf32>
    %287 = vector.shape_cast %286 : vector<1x4x256xf32> to vector<4x256xf32>
    %288 = vector.shape_cast %285 : vector<4x256xf32> to vector<1x4x256xf32>
    tpu.vector_store %arg5[%c0_317, %c0_318, %c0_319], %288 {strides = array<i32>} : memref<2x4x256xf32, #tpu.memory_space<vmem>>, vector<1x4x256xf32>,
    %289 = vector.extract_strided_slice %284 {offsets = [0, 256], sizes = [4, 256], strides = [1, 1]} : vector<4x512xf32> to vector<4x256xf32>
    %c1_320 = arith.constant 1 : index
    %c0_321 = arith.constant 0 : index
    %c0_322 = arith.constant 0 : index
    %290 = vector.load %arg5[%c1_320, %c0_321, %c0_322] : memref<2x4x256xf32, #tpu.memory_space<vmem>>, vector<1x4x256xf32>
    %291 = vector.shape_cast %290 : vector<1x4x256xf32> to vector<4x256xf32>
    %292 = vector.shape_cast %289 : vector<4x256xf32> to vector<1x4x256xf32>
    tpu.vector_store %arg5[%c1_320, %c0_321, %c0_322], %292 {strides = array<i32>} : memref<2x4x256xf32, #tpu.memory_space<vmem>>, vector<1x4x256xf32>,
    return
  }
  func.func @transform_0(%arg0: i32) -> (i32, i32, i32) {
    %c0_i32 = arith.constant 0 : i32
    %c0_i32_0 = arith.constant 0 : i32
    %c0_i32_1 = arith.constant 0 : i32
    return %arg0, %c0_i32, %c0_i32_0 : i32, i32, i32
  }
  func.func @transform_1(%arg0: i32) -> (i32, i32) {
    %c0_i32 = arith.constant 0 : i32
    %c0_i32_0 = arith.constant 0 : i32
    %c0_i32_1 = arith.constant 0 : i32
    return %c0_i32, %c0_i32_0 : i32, i32
  }
  func.func @transform_2(%arg0: i32) -> (i32, i32) {
    %c0_i32 = arith.constant 0 : i32
    %c0_i32_0 = arith.constant 0 : i32
    %c0_i32_1 = arith.constant 0 : i32
    return %c0_i32, %c0_i32_0 : i32, i32
  }
  func.func @transform_3(%arg0: i32) -> (i32, i32) {
    %c0_i32 = arith.constant 0 : i32
    %c0_i32_0 = arith.constant 0 : i32
    %c0_i32_1 = arith.constant 0 : i32
    return %c0_i32, %c0_i32_0 : i32, i32
  }
  func.func @transform_4(%arg0: i32) -> (i32, i32, i32) {
    %c0_i32 = arith.constant 0 : i32
    %c0_i32_0 = arith.constant 0 : i32
    %c0_i32_1 = arith.constant 0 : i32
    return %arg0, %c0_i32, %c0_i32_0 : i32, i32, i32
  }
}

</mosaic_0001>

<llo_original>
// kernel: tpu_custom_call.1
$region0: #{tpu_custom_call.1}
  #allocation0 [shape = 'u32[]', space=smem, size = 0x4, offset = 0x4, fixed_abs, tag = 'smem constant byte address 0x4 - core index']
  #allocation1 [shape = 'u32[72,128]{1,0:T(1,128)}', space=vmem, size = 0x9000, scoped, tag = 'internal scratch']
  #allocation2 [shape = 'f32[8,896]{1,0:T(8,128)}', space=vmem, size = 0x7000, scoped, tag = 'scratch operand']
  #allocation3 [shape = 'f32[72,512]{1,0:T(8,128)}', space=vmem, size = 0x24000, scoped, tag = 'scratch operand']
  %s0 = inlined_call_operand.hbm [shape: f32[2,4,256], index: 0, kind: input, shape index: {}]
  %s1 = inlined_call_operand.vmem [shape: f32[32,128], index: 1, kind: input, shape index: {}]
  %s2 = inlined_call_operand.vmem [shape: f32[32,1], index: 2, kind: input, shape index: {}]
  %s3 = inlined_call_operand.hbm [shape: f32[8,256], index: 3, kind: input, shape index: {}]
  %s4 = inlined_call_operand.hbm [shape: f32[2,4,256], index: 4, kind: output, shape index: {}]
  %s5 = sld [smem:[#allocation0]]
  $region34: #{tpu_custom_call.1} parent=0
    _
  %s7 = ssub.s32 1, %s5
  %s8 = scalar_select 0, %s7, %s5
  $region1: #{tpu_custom_call.1} parent=0
    #allocation4 [shape = 'u8[8192]{0}', space=vmem, size = 0x2000, scoped, tag = 'input window, operand 0, single buffered']
    #allocation5 [shape = 's32[1]{0}', space=sflag, size = 0x4, scoped, tag = 'scoped memory for tpu_custom_call.1']
    #allocation6 [shape = 's32[1]{0}', space=sflag, size = 0x4, scoped, tag = 'scoped memory for tpu_custom_call.1']
    #allocation7 [shape = 'u8[8192]{0}', space=vmem, size = 0x2000, scoped, tag = 'input window, operand 3, single buffered']
    #allocation8 [shape = 's32[1]{0}', space=sflag, size = 0x4, scoped, tag = 'scoped memory for tpu_custom_call.1']
    #allocation9 [shape = 'u8[8192]{0}', space=vmem, size = 0x2000, scoped, tag = 'output window, operand 0, single buffered']
    %9 = vsyncpa [#allocation5], 0
    %10 = vsyncpa [#allocation8], 0
    %11 = vsyncpa [#allocation6], 0
    // Predicated region
    $region2: #{tpu_custom_call.1} parent=1 // pred_check
      _
    $region3: #{tpu_custom_call.1} parent=1 // pred_check_branch
      %13 = sbr.rel (0) target = $region5
    $region4: #{tpu_custom_call.1} parent=1 // pred_region
      %15 = vsyncadd [#allocation5], 0
      %s16 = sshll.u32 %s0, 4
      %s17 = int_to_ptr.hbm [resolvable:$true] %s16
      %s18 = sshll.u32 [#allocation4], 4
      %s19 = int_to_ptr.vmem [resolvable:$true] %s18
      %24 = dma.hbm_to_vmem [thread:$0]  %s17, 256, %s19, [#allocation5], 128, 128, 8
    $region5: #{tpu_custom_call.1} parent=1 // pred_fallthru
      _
    // Predicated region
    $region6: #{tpu_custom_call.1} parent=1 // pred_check
      _
    $region7: #{tpu_custom_call.1} parent=1 // pred_check_branch
      %26 = sbr.rel (0) target = $region9
    $region8: #{tpu_custom_call.1} parent=1 // pred_region
      _
    $region9: #{tpu_custom_call.1} parent=1 // pred_fallthru
      _
    // Predicated region
    $region10: #{tpu_custom_call.1} parent=1 // pred_check
      _
    $region11: #{tpu_custom_call.1} parent=1 // pred_check_branch
      %28 = sbr.rel (0) target = $region13
    $region12: #{tpu_custom_call.1} parent=1 // pred_region
      _
    $region13: #{tpu_custom_call.1} parent=1 // pred_fallthru
      _
    // Predicated region
    $region14: #{tpu_custom_call.1} parent=1 // pred_check
      _
    $region15: #{tpu_custom_call.1} parent=1 // pred_check_branch
      %30 = sbr.rel (0) target = $region17
    $region16: #{tpu_custom_call.1} parent=1 // pred_region
      %32 = vsyncadd [#allocation8], 0
      %s34 = sshll.u32 %s3, 4
      %s35 = int_to_ptr.hbm [resolvable:$true] %s34
      %s36 = sshll.u32 [#allocation7], 4
      %s37 = int_to_ptr.vmem [resolvable:$true] %s36
      %39 = dma.hbm_to_vmem [thread:$0]  %s35, 256, %s37, [#allocation8]
    $region17: #{tpu_custom_call.1} parent=1 // pred_fallthru
      _
    // Predicated region
    $region18: #{tpu_custom_call.1} parent=1 // pred_check
      _
    $region19: #{tpu_custom_call.1} parent=1 // pred_check_branch
      %41 = sbr.rel (0) target = $region21
    $region20: #{tpu_custom_call.1} parent=1 // pred_region
      %43 = dma.done [#allocation5], 256
    $region21: #{tpu_custom_call.1} parent=1 // pred_fallthru
      _
    // Predicated region
    $region22: #{tpu_custom_call.1} parent=1 // pred_check
      _
    $region23: #{tpu_custom_call.1} parent=1 // pred_check_branch
      %45 = sbr.rel (0) target = $region25
    $region24: #{tpu_custom_call.1} parent=1 // pred_region
      %47 = dma.done [#allocation8], 256
    $region25: #{tpu_custom_call.1} parent=1 // pred_fallthru
      _
    %48 = vst [vmem:[#allocation2] sm:$0xff] 0.0
    %49 = vst [vmem:[#allocation2 + $0x8] sm:$0xff] 0.0
    %50 = vst [vmem:[#allocation2 + $0x10] sm:$0xff] 0.0
    %51 = vst [vmem:[#allocation2 + $0x18] sm:$0xff] 0.0
    %52 = vst [vmem:[#allocation2 + $0x20] sm:$0xff] 0.0
    %53 = vst [vmem:[#allocation2 + $0x28] sm:$0xff] 0.0
    %54 = vst [vmem:[#allocation2 + $0x30] sm:$0xff] 0.0
    %v55 = vld [vmem:[#allocation4] sm:$0xff]
    %57 = vst [vmem:[#allocation1] ss:$2 sm:$0xff] %v55
    %v58 = vld.sshfl [vmem:[#allocation1] sm:$0xff pattern:$0x75316420]
    %v59 = vld.sshfl [vmem:[#allocation1 + $0x8] sm:$0xff pattern:$0x75316420]
    %62 = vst [vmem:[#allocation2 + $0x8] sm:$0xf] %v58
    %63 = vst [vmem:[#allocation2 + $0x10] sm:$0xf] %v59
    %s64 = scalar_lea.vmem [#allocation4], 8
    %v65 = vld [vmem:[%s64] sm:$0xff]
    %67 = vst [vmem:[#allocation1] ss:$2 sm:$0xff] %v65
    %v68 = vld.sshfl [vmem:[#allocation1] sm:$0xff pattern:$0x75316420]
    %v69 = vld.sshfl [vmem:[#allocation1 + $0x8] sm:$0xff pattern:$0x75316420]
    %72 = vst [vmem:[#allocation2 + $0x20] sm:$0xf] %v68
    %73 = vst [vmem:[#allocation2 + $0x28] sm:$0xf] %v69
    %v74 = vld [vmem:[#allocation2] sm:$0xff]
    %v75 = vld [vmem:[#allocation2 + $0x8] sm:$0xff]
    %v76 = vld [vmem:[#allocation2 + $0x10] sm:$0xff]
    %v77 = vld [vmem:[#allocation7] ss:$8 sm:$0x3]
    %v79 = vperm.slane %v77, 0
    %v80 = vperm.slane %v77, 1
    %81 = vrot.lane.b32.xlu0 %v79, 111
    %v82 = vpop.permute.xlu0 %81
    %83 = vrot.lane.b32.xlu0 %v80, 111
    %v84 = vpop.permute.xlu0 %83
    %vm85 = vcmask 908288
    %v86 = vsel %vm85, %v82, %v84
    %v90 = vmul.f32 %v74, %v82
    %v91 = vmul.f32 %v75, %v86
    %v92 = vmul.f32 %v76, %v84
    %96 = vrot.lane.b32.xlu0 %v90, 17
    %v97 = vpop.permute.xlu0 %96
    %98 = vrot.lane.b32.xlu0 %v91, 17
    %v99 = vpop.permute.xlu0 %98
    %100 = vrot.lane.b32.xlu0 %v92, 17
    %v101 = vpop.permute.xlu0 %100
    %vm102 = vcmask 138240
    %v103 = vsel %vm102, %v97, %v99
    %v104 = vsel %vm102, %v99, %v101
    %107 = vst [vmem:[#allocation3] sm:$0xff] %v103
    %108 = vst [vmem:[#allocation3 + $0x8] sm:$0xff] %v104
    %v109 = vld [vmem:[#allocation2 + $0x18] sm:$0xff]
    %v110 = vld [vmem:[#allocation2 + $0x20] sm:$0xff]
    %v111 = vld [vmem:[#allocation2 + $0x28] sm:$0xff]
    %v112 = vld [vmem:[#allocation7] ss:$8 sm:$0x3]
    %v114 = vperm.slane %v112, 0
    %v115 = vperm.slane %v112, 1
    %116 = vrot.lane.b32.xlu0 %v114, 111
    %v117 = vpop.permute.xlu0 %116
    %118 = vrot.lane.b32.xlu0 %v115, 111
    %v119 = vpop.permute.xlu0 %118
    %v120 = vsel %vm85, %v117, %v119
    %v124 = vmul.f32 %v109, %v117
    %v125 = vmul.f32 %v110, %v120
    %v126 = vmul.f32 %v111, %v119
    %130 = vrot.lane.b32.xlu0 %v124, 17
    %v131 = vpop.permute.xlu0 %130
    %132 = vrot.lane.b32.xlu0 %v125, 17
    %v133 = vpop.permute.xlu0 %132
    %134 = vrot.lane.b32.xlu0 %v126, 17
    %v135 = vpop.permute.xlu0 %134
    %v136 = vsel %vm102, %v131, %v133
    %v137 = vsel %vm102, %v133, %v135
    %140 = vst [vmem:[#allocation3 + $0x10] sm:$0xff] %v136
    %141 = vst [vmem:[#allocation3 + $0x18] sm:$0xff] %v137
    %v142 = vld [vmem:[#allocation2] sm:$0xff]
    %v143 = vld [vmem:[#allocation2 + $0x8] sm:$0xff]
    %v144 = vld [vmem:[#allocation2 + $0x10] sm:$0xff]
    %148 = vrot.lane.b32.xlu0 %v142, 16
    %v149 = vpop.permute.xlu0 %148
    %150 = vrot.lane.b32.xlu0 %v143, 16
    %v151 = vpop.permute.xlu0 %150
    %152 = vrot.lane.b32.xlu0 %v144, 16
    %v153 = vpop.permute.xlu0 %152
    %vm154 = vcmask 130048
    %v155 = vsel %vm154, %v149, %v151
    %v156 = vsel %vm154, %v151, %v153
    %159 = vst [vmem:[#allocation3 + $0x20] sm:$0xff] %v155
    %160 = vst [vmem:[#allocation3 + $0x28] sm:$0xff] %v156
    %v161 = vld [vmem:[#allocation2 + $0x18] sm:$0xff]
    %v162 = vld [vmem:[#allocation2 + $0x20] sm:$0xff]
    %v163 = vld [vmem:[#allocation2 + $0x28] sm:$0xff]
    %167 = vrot.lane.b32.xlu0 %v161, 16
    %v168 = vpop.permute.xlu0 %167
    %169 = vrot.lane.b32.xlu0 %v162, 16
    %v170 = vpop.permute.xlu0 %169
    %171 = vrot.lane.b32.xlu0 %v163, 16
    %v172 = vpop.permute.xlu0 %171
    %v173 = vsel %vm154, %v168, %v170
    %v174 = vsel %vm154, %v170, %v172
    %177 = vst [vmem:[#allocation3 + $0x30] sm:$0xff] %v173
    %178 = vst [vmem:[#allocation3 + $0x38] sm:$0xff] %v174
    %v179 = vld [vmem:[#allocation2] sm:$0xff]
    %v180 = vld [vmem:[#allocation2 + $0x8] sm:$0xff]
    %v181 = vld [vmem:[#allocation2 + $0x10] sm:$0xff]
    %s182 = scalar_lea.vmem [#allocation7], 2
    %v183 = vld [vmem:[%s182] ss:$8 sm:$0x3]
    %v185 = vperm.slane %v183, 0
    %v186 = vperm.slane %v183, 1
    %187 = vrot.lane.b32.xlu0 %v185, 113
    %v188 = vpop.permute.xlu0 %187
    %189 = vrot.lane.b32.xlu0 %v186, 113
    %v190 = vpop.permute.xlu0 %189
    %vm191 = vcmask 924672
    %v192 = vsel %vm191, %v188, %v190
    %v196 = vmul.f32 %v179, %v188
    %v197 = vmul.f32 %v180, %v192
    %v198 = vmul.f32 %v181, %v190
    %202 = vrot.lane.b32.xlu0 %v196, 15
    %v203 = vpop.permute.xlu0 %202
    %204 = vrot.lane.b32.xlu0 %v197, 15
    %v205 = vpop.permute.xlu0 %204
    %206 = vrot.lane.b32.xlu0 %v198, 15
    %v207 = vpop.permute.xlu0 %206
    %vm208 = vcmask 121856
    %v209 = vsel %vm208, %v203, %v205
    %v210 = vsel %vm208, %v205, %v207
    %213 = vst [vmem:[#allocation3 + $0x40] sm:$0xff] %v209
    %214 = vst [vmem:[#allocation3 + $0x48] sm:$0xff] %v210
    %v215 = vld [vmem:[#allocation2 + $0x18] sm:$0xff]
    %v216 = vld [vmem:[#allocation2 + $0x20] sm:$0xff]
    %v217 = vld [vmem:[#allocation2 + $0x28] sm:$0xff]
    %v218 = vld [vmem:[%s182] ss:$8 sm:$0x3]
    %v220 = vperm.slane %v218, 0
    %v221 = vperm.slane %v218, 1
    %222 = vrot.lane.b32.xlu0 %v220, 113
    %v223 = vpop.permute.xlu0 %222
    %224 = vrot.lane.b32.xlu0 %v221, 113
    %v225 = vpop.permute.xlu0 %224
    %v226 = vsel %vm191, %v223, %v225
    %v230 = vmul.f32 %v215, %v223
    %v231 = vmul.f32 %v216, %v226
    %v232 = vmul.f32 %v217, %v225
    %236 = vrot.lane.b32.xlu0 %v230, 15
    %v237 = vpop.permute.xlu0 %236
    %238 = vrot.lane.b32.xlu0 %v231, 15
    %v239 = vpop.permute.xlu0 %238
    %240 = vrot.lane.b32.xlu0 %v232, 15
    %v241 = vpop.permute.xlu0 %240
    %v242 = vsel %vm208, %v237, %v239
    %v243 = vsel %vm208, %v239, %v241
    %246 = vst [vmem:[#allocation3 + $0x50] sm:$0xff] %v242
    %247 = vst [vmem:[#allocation3 + $0x58] sm:$0xff] %v243
    %v248 = vld [vmem:[#allocation2] sm:$0xff]
    %v249 = vld [vmem:[#allocation2 + $0x8] sm:$0xff]
    %v250 = vld [vmem:[#allocation2 + $0x10] sm:$0xff]
    %v251 = vld [vmem:[#allocation7] ss:$8 sm:$0x3]
    %v253 = vperm.slane %v251, 0
    %v254 = vperm.slane %v251, 1
    %255 = vrot.lane.b32.xlu0 %v253, 127
    %v256 = vpop.permute.xlu0 %255
    %257 = vrot.lane.b32.xlu0 %v254, 127
    %v258 = vpop.permute.xlu0 %257
    %vm259 = vcmask 1039360
    %v260 = vsel %vm259, %v256, %v258
    %v264 = vmul.f32 %v248, %v256
    %v265 = vmul.f32 %v249, %v260
    %v266 = vmul.f32 %v250, %v258
    %270 = vrot.lane.b32.xlu0 %v264, 1
    %v271 = vpop.permute.xlu0 %270
    %272 = vrot.lane.b32.xlu0 %v265, 1
    %v273 = vpop.permute.xlu0 %272
    %274 = vrot.lane.b32.xlu0 %v266, 1
    %v275 = vpop.permute.xlu0 %274
    %vm276 = vcmask 7168
    %v277 = vsel %vm276, %v271, %v273
    %v278 = vsel %vm276, %v273, %v275
    %281 = vst [vmem:[#allocation3 + $0x60] sm:$0xff] %v277
    %282 = vst [vmem:[#allocation3 + $0x68] sm:$0xff] %v278
    %v283 = vld [vmem:[#allocation2 + $0x18] sm:$0xff]
    %v284 = vld [vmem:[#allocation2 + $0x20] sm:$0xff]
    %v285 = vld [vmem:[#allocation2 + $0x28] sm:$0xff]
    %v286 = vld [vmem:[#allocation7] ss:$8 sm:$0x3]
    %v288 = vperm.slane %v286, 0
    %v289 = vperm.slane %v286, 1
    %290 = vrot.lane.b32.xlu0 %v288, 127
    %v291 = vpop.permute.xlu0 %290
    %292 = vrot.lane.b32.xlu0 %v289, 127
    %v293 = vpop.permute.xlu0 %292
    %v294 = vsel %vm259, %v291, %v293
    %v298 = vmul.f32 %v283, %v291
    %v299 = vmul.f32 %v284, %v294
    %v300 = vmul.f32 %v285, %v293
    %304 = vrot.lane.b32.xlu0 %v298, 1
    %v305 = vpop.permute.xlu0 %304
    %306 = vrot.lane.b32.xlu0 %v299, 1
    %v307 = vpop.permute.xlu0 %306
    %308 = vrot.lane.b32.xlu0 %v300, 1
    %v309 = vpop.permute.xlu0 %308
    %v310 = vsel %vm276, %v305, %v307
    %v311 = vsel %vm276, %v307, %v309
    %314 = vst [vmem:[#allocation3 + $0x70] sm:$0xff] %v310
    %315 = vst [vmem:[#allocation3 + $0x78] sm:$0xff] %v311
    %v316 = vld [vmem:[#allocation2 + $0x8] sm:$0xff]
    %v317 = vld [vmem:[#allocation2 + $0x10] sm:$0xff]
    %318 = vst [vmem:[#allocation3 + $0x80] sm:$0xff] %v316
    %319 = vst [vmem:[#allocation3 + $0x88] sm:$0xff] %v317
    %v320 = vld [vmem:[#allocation2 + $0x20] sm:$0xff]
    %v321 = vld [vmem:[#allocation2 + $0x28] sm:$0xff]
    %322 = vst [vmem:[#allocation3 + $0x90] sm:$0xff] %v320
    %323 = vst [vmem:[#allocation3 + $0x98] sm:$0xff] %v321
    %v324 = vld [vmem:[#allocation2 + $0x8] sm:$0xff]
    %v325 = vld [vmem:[#allocation2 + $0x10] sm:$0xff]
    %v326 = vld [vmem:[#allocation2 + $0x18] sm:$0xff]
    %v327 = vld [vmem:[%s182] ss:$8 sm:$0x3]
    %v329 = vperm.slane %v327, 0
    %v330 = vperm.slane %v327, 1
    %331 = vrot.lane.b32.xlu0 %v329, 1
    %v332 = vpop.permute.xlu0 %331
    %333 = vrot.lane.b32.xlu0 %v330, 1
    %v334 = vpop.permute.xlu0 %333
    %v335 = vsel %vm276, %v332, %v334
    %v339 = vmul.f32 %v324, %v332
    %v340 = vmul.f32 %v325, %v335
    %v341 = vmul.f32 %v326, %v334
    %345 = vrot.lane.b32.xlu0 %v339, 127
    %v346 = vpop.permute.xlu0 %345
    %347 = vrot.lane.b32.xlu0 %v340, 127
    %v348 = vpop.permute.xlu0 %347
    %349 = vrot.lane.b32.xlu0 %v341, 127
    %v350 = vpop.permute.xlu0 %349
    %v351 = vsel %vm259, %v346, %v348
    %v352 = vsel %vm259, %v348, %v350
    %355 = vst [vmem:[#allocation3 + $0xa0] sm:$0xff] %v351
    %356 = vst [vmem:[#allocation3 + $0xa8] sm:$0xff] %v352
    %v357 = vld [vmem:[#allocation2 + $0x20] sm:$0xff]
    %v358 = vld [vmem:[#allocation2 + $0x28] sm:$0xff]
    %v359 = vld [vmem:[#allocation2 + $0x30] sm:$0xff]
    %v360 = vld [vmem:[%s182] ss:$8 sm:$0x3]
    %v362 = vperm.slane %v360, 0
    %v363 = vperm.slane %v360, 1
    %364 = vrot.lane.b32.xlu0 %v362, 1
    %v365 = vpop.permute.xlu0 %364
    %366 = vrot.lane.b32.xlu0 %v363, 1
    %v367 = vpop.permute.xlu0 %366
    %v368 = vsel %vm276, %v365, %v367
    %v372 = vmul.f32 %v357, %v365
    %v373 = vmul.f32 %v358, %v368
    %v374 = vmul.f32 %v359, %v367
    %378 = vrot.lane.b32.xlu0 %v372, 127
    %v379 = vpop.permute.xlu0 %378
    %380 = vrot.lane.b32.xlu0 %v373, 127
    %v381 = vpop.permute.xlu0 %380
    %382 = vrot.lane.b32.xlu0 %v374, 127
    %v383 = vpop.permute.xlu0 %382
    %v384 = vsel %vm259, %v379, %v381
    %v385 = vsel %vm259, %v381, %v383
    %388 = vst [vmem:[#allocation3 + $0xb0] sm:$0xff] %v384
    %389 = vst [vmem:[#allocation3 + $0xb8] sm:$0xff] %v385
    %v390 = vld [vmem:[#allocation2 + $0x8] sm:$0xff]
    %v391 = vld [vmem:[#allocation2 + $0x10] sm:$0xff]
    %v392 = vld [vmem:[#allocation2 + $0x18] sm:$0xff]
    %v393 = vld [vmem:[#allocation7] ss:$8 sm:$0x3]
    %v395 = vperm.slane %v393, 0
    %v396 = vperm.slane %v393, 1
    %397 = vrot.lane.b32.xlu0 %v395, 15
    %v398 = vpop.permute.xlu0 %397
    %399 = vrot.lane.b32.xlu0 %v396, 15
    %v400 = vpop.permute.xlu0 %399
    %v401 = vsel %vm208, %v398, %v400
    %v405 = vmul.f32 %v390, %v398
    %v406 = vmul.f32 %v391, %v401
    %v407 = vmul.f32 %v392, %v400
    %411 = vrot.lane.b32.xlu0 %v405, 113
    %v412 = vpop.permute.xlu0 %411
    %413 = vrot.lane.b32.xlu0 %v406, 113
    %v414 = vpop.permute.xlu0 %413
    %415 = vrot.lane.b32.xlu0 %v407, 113
    %v416 = vpop.permute.xlu0 %415
    %v417 = vsel %vm191, %v412, %v414
    %v418 = vsel %vm191, %v414, %v416
    %421 = vst [vmem:[#allocation3 + $0xc0] sm:$0xff] %v417
    %422 = vst [vmem:[#allocation3 + $0xc8] sm:$0xff] %v418
    %v423 = vld [vmem:[#allocation2 + $0x20] sm:$0xff]
    %v424 = vld [vmem:[#allocation2 + $0x28] sm:$0xff]
    %v425 = vld [vmem:[#allocation2 + $0x30] sm:$0xff]
    %v426 = vld [vmem:[#allocation7] ss:$8 sm:$0x3]
    %v428 = vperm.slane %v426, 0
    %v429 = vperm.slane %v426, 1
    %430 = vrot.lane.b32.xlu0 %v428, 15
    %v431 = vpop.permute.xlu0 %430
    %432 = vrot.lane.b32.xlu0 %v429, 15
    %v433 = vpop.permute.xlu0 %432
    %v434 = vsel %vm208, %v431, %v433
    %v438 = vmul.f32 %v423, %v431
    %v439 = vmul.f32 %v424, %v434
    %v440 = vmul.f32 %v425, %v433
    %444 = vrot.lane.b32.xlu0 %v438, 113
    %v445 = vpop.permute.xlu0 %444
    %446 = vrot.lane.b32.xlu0 %v439, 113
    %v447 = vpop.permute.xlu0 %446
    %448 = vrot.lane.b32.xlu0 %v440, 113
    %v449 = vpop.permute.xlu0 %448
    %v450 = vsel %vm191, %v445, %v447
    %v451 = vsel %vm191, %v447, %v449
    %454 = vst [vmem:[#allocation3 + $0xd0] sm:$0xff] %v450
    %455 = vst [vmem:[#allocation3 + $0xd8] sm:$0xff] %v451
    %v456 = vld [vmem:[#allocation2 + $0x8] sm:$0xff]
    %v457 = vld [vmem:[#allocation2 + $0x10] sm:$0xff]
    %v458 = vld [vmem:[#allocation2 + $0x18] sm:$0xff]
    %462 = vrot.lane.b32.xlu0 %v456, 112
    %v463 = vpop.permute.xlu0 %462
    %464 = vrot.lane.b32.xlu0 %v457, 112
    %v465 = vpop.permute.xlu0 %464
    %466 = vrot.lane.b32.xlu0 %v458, 112
    %v467 = vpop.permute.xlu0 %466
    %vm468 = vcmask 916480
    %v469 = vsel %vm468, %v463, %v465
    %v470 = vsel %vm468, %v465, %v467
    %473 = vst [vmem:[#allocation3 + $0xe0] sm:$0xff] %v469
    %474 = vst [vmem:[#allocation3 + $0xe8] sm:$0xff] %v470
    %v475 = vld [vmem:[#allocation2 + $0x20] sm:$0xff]
    %v476 = vld [vmem:[#allocation2 + $0x28] sm:$0xff]
    %v477 = vld [vmem:[#allocation2 + $0x30] sm:$0xff]
    %481 = vrot.lane.b32.xlu0 %v475, 112
    %v482 = vpop.permute.xlu0 %481
    %483 = vrot.lane.b32.xlu0 %v476, 112
    %v484 = vpop.permute.xlu0 %483
    %485 = vrot.lane.b32.xlu0 %v477, 112
    %v486 = vpop.permute.xlu0 %485
    %v487 = vsel %vm468, %v482, %v484
    %v488 = vsel %vm468, %v484, %v486
    %491 = vst [vmem:[#allocation3 + $0xf0] sm:$0xff] %v487
    %492 = vst [vmem:[#allocation3 + $0xf8] sm:$0xff] %v488
    %v493 = vld [vmem:[#allocation2 + $0x8] sm:$0xff]
    %v494 = vld [vmem:[#allocation2 + $0x10] sm:$0xff]
    %v495 = vld [vmem:[#allocation2 + $0x18] sm:$0xff]
    %v496 = vld [vmem:[%s182] ss:$8 sm:$0x3]
    %v498 = vperm.slane %v496, 0
    %v499 = vperm.slane %v496, 1
    %500 = vrot.lane.b32.xlu0 %v498, 17
    %v501 = vpop.permute.xlu0 %500
    %502 = vrot.lane.b32.xlu0 %v499, 17
    %v503 = vpop.permute.xlu0 %502
    %v504 = vsel %vm102, %v501, %v503
    %v508 = vmul.f32 %v493, %v501
    %v509 = vmul.f32 %v494, %v504
    %v510 = vmul.f32 %v495, %v503
    %514 = vrot.lane.b32.xlu0 %v508, 111
    %v515 = vpop.permute.xlu0 %514
    %516 = vrot.lane.b32.xlu0 %v509, 111
    %v517 = vpop.permute.xlu0 %516
    %518 = vrot.lane.b32.xlu0 %v510, 111
    %v519 = vpop.permute.xlu0 %518
    %v520 = vsel %vm85, %v515, %v517
    %v521 = vsel %vm85, %v517, %v519
    %524 = vst [vmem:[#allocation3 + $0x100] sm:$0xff] %v520
    %525 = vst [vmem:[#allocation3 + $0x108] sm:$0xff] %v521
    %v526 = vld [vmem:[#allocation2 + $0x20] sm:$0xff]
    %v527 = vld [vmem:[#allocation2 + $0x28] sm:$0xff]
    %v528 = vld [vmem:[#allocation2 + $0x30] sm:$0xff]
    %v529 = vld [vmem:[%s182] ss:$8 sm:$0x3]
    %v531 = vperm.slane %v529, 0
    %v532 = vperm.slane %v529, 1
    %533 = vrot.lane.b32.xlu0 %v531, 17
    %v534 = vpop.permute.xlu0 %533
    %535 = vrot.lane.b32.xlu0 %v532, 17
    %v536 = vpop.permute.xlu0 %535
    %v537 = vsel %vm102, %v534, %v536
    %v541 = vmul.f32 %v526, %v534
    %v542 = vmul.f32 %v527, %v537
    %v543 = vmul.f32 %v528, %v536
    %547 = vrot.lane.b32.xlu0 %v541, 111
    %v548 = vpop.permute.xlu0 %547
    %549 = vrot.lane.b32.xlu0 %v542, 111
    %v550 = vpop.permute.xlu0 %549
    %551 = vrot.lane.b32.xlu0 %v543, 111
    %v552 = vpop.permute.xlu0 %551
    %v553 = vsel %vm85, %v548, %v550
    %v554 = vsel %vm85, %v550, %v552
    %557 = vst [vmem:[#allocation3 + $0x110] sm:$0xff] %v553
    %558 = vst [vmem:[#allocation3 + $0x118] sm:$0xff] %v554
    %v559 = vld [vmem:[%s1] sm:$0xff]
    %v560 = vld [vmem:[#allocation3] sm:$0xff]
    %v561 = vld [vmem:[#allocation3 + $0x8] sm:$0xff]
    %v562 = vld [vmem:[#allocation3 + $0x10] sm:$0xff]
    %v563 = vld [vmem:[#allocation3 + $0x18] sm:$0xff]
    %v564 = vld [vmem:[#allocation3 + $0x20] sm:$0xff]
    %v565 = vld [vmem:[#allocation3 + $0x28] sm:$0xff]
    %v566 = vld [vmem:[#allocation3 + $0x30] sm:$0xff]
    %v567 = vld [vmem:[#allocation3 + $0x38] sm:$0xff]
    %v568 = vld [vmem:[#allocation3 + $0x40] sm:$0xff]
    %v569 = vld [vmem:[#allocation3 + $0x48] sm:$0xff]
    %v570 = vld [vmem:[#allocation3 + $0x50] sm:$0xff]
    %v571 = vld [vmem:[#allocation3 + $0x58] sm:$0xff]
    %v572 = vld [vmem:[#allocation3 + $0x60] sm:$0xff]
    %v573 = vld [vmem:[#allocation3 + $0x68] sm:$0xff]
    %v574 = vld [vmem:[#allocation3 + $0x70] sm:$0xff]
    %v575 = vld [vmem:[#allocation3 + $0x78] sm:$0xff]
    %v576 = vld [vmem:[#allocation3 + $0x80] sm:$0xff]
    %v577 = vld [vmem:[#allocation3 + $0x88] sm:$0xff]
    %v578 = vld [vmem:[#allocation3 + $0x90] sm:$0xff]
    %v579 = vld [vmem:[#allocation3 + $0x98] sm:$0xff]
    %v580 = vld [vmem:[#allocation3 + $0xa0] sm:$0xff]
    %v581 = vld [vmem:[#allocation3 + $0xa8] sm:$0xff]
    %v582 = vld [vmem:[#allocation3 + $0xb0] sm:$0xff]
    %v583 = vld [vmem:[#allocation3 + $0xb8] sm:$0xff]
    %v584 = vld [vmem:[#allocation3 + $0xc0] sm:$0xff]
    %v585 = vld [vmem:[#allocation3 + $0xc8] sm:$0xff]
    %v586 = vld [vmem:[#allocation3 + $0xd0] sm:$0xff]
    %v587 = vld [vmem:[#allocation3 + $0xd8] sm:$0xff]
    %v588 = vld [vmem:[#allocation3 + $0xe0] sm:$0xff]
    %v589 = vld [vmem:[#allocation3 + $0xe8] sm:$0xff]
    %v590 = vld [vmem:[#allocation3 + $0xf0] sm:$0xff]
    %v591 = vld [vmem:[#allocation3 + $0xf8] sm:$0xff]
    %v592 = vld [vmem:[#allocation3 + $0x100] sm:$0xff]
    %v593 = vld [vmem:[#allocation3 + $0x108] sm:$0xff]
    %v594 = vld [vmem:[#allocation3 + $0x110] sm:$0xff]
    %v595 = vld [vmem:[#allocation3 + $0x118] sm:$0xff]
    %v596 = vld [vmem:[%s2] sm:$0xff]
    %598 = vset.pattern.permute.xlu0 0
    %599 = vperm.xlu0 %598, %v596
    %v600 = vpop.permute.xlu0 %599
    %vm602 = vcmask 588800
    %v604 = vsel %vm602, %v559, 0
    %606 = vmatpush.msra.mxu0 0.0
    %607 = vmatpush.msra.mxu0 0.0
    %608 = vmatpush.msra.mxu0 0.0
    %609 = vmatpush.msra.mxu0 0.0
    %610 = vmatpush.msra.mxu0 0.0
    %611 = vmatpush.msra.mxu0 0.0
    %612 = vmatpush.msra.mxu0 0.0
    %613 = vmatpush.msra.mxu0 %v592
    %614 = vmatpush.msra.mxu0 %v588
    %615 = vmatpush.msra.mxu0 %v584
    %616 = vmatpush.msra.mxu0 %v580
    %617 = vmatpush.msra.mxu0 %v576
    %618 = vmatpush.msra.mxu0 %v572
    %619 = vmatpush.msra.mxu0 %v568
    %620 = vmatpush.msra.mxu0 %v564
    %621 = vmatpush.msra.mxu0 %v560
    %622 = vmatmul.f32.gmra.mxu0 %v604
    %v623 = vpop.f32.mrf.mxu0
    %v624 = vadd.f32 %v600, %v623
    %625 = vdwg.mxu0
    %626 = vmatpush.msra.mxu0 0.0
    %627 = vmatpush.msra.mxu0 0.0
    %628 = vmatpush.msra.mxu0 0.0
    %629 = vmatpush.msra.mxu0 0.0
    %630 = vmatpush.msra.mxu0 0.0
    %631 = vmatpush.msra.mxu0 0.0
    %632 = vmatpush.msra.mxu0 0.0
    %633 = vmatpush.msra.mxu0 %v593
    %634 = vmatpush.msra.mxu0 %v589
    %635 = vmatpush.msra.mxu0 %v585
    %636 = vmatpush.msra.mxu0 %v581
    %637 = vmatpush.msra.mxu0 %v577
    %638 = vmatpush.msra.mxu0 %v573
    %639 = vmatpush.msra.mxu0 %v569
    %640 = vmatpush.msra.mxu0 %v565
    %641 = vmatpush.msra.mxu0 %v561
    %642 = vmatmul.f32.gmra.mxu0 %v604
    %v643 = vpop.f32.mrf.mxu0
    %v644 = vadd.f32 %v600, %v643
    %645 = vdwg.mxu0
    %646 = vmatpush.msra.mxu0 0.0
    %647 = vmatpush.msra.mxu0 0.0
    %648 = vmatpush.msra.mxu0 0.0
    %649 = vmatpush.msra.mxu0 0.0
    %650 = vmatpush.msra.mxu0 0.0
    %651 = vmatpush.msra.mxu0 0.0
    %652 = vmatpush.msra.mxu0 0.0
    %653 = vmatpush.msra.mxu0 %v594
    %654 = vmatpush.msra.mxu0 %v590
    %655 = vmatpush.msra.mxu0 %v586
    %656 = vmatpush.msra.mxu0 %v582
    %657 = vmatpush.msra.mxu0 %v578
    %658 = vmatpush.msra.mxu0 %v574
    %659 = vmatpush.msra.mxu0 %v570
    %660 = vmatpush.msra.mxu0 %v566
    %661 = vmatpush.msra.mxu0 %v562
    %662 = vmatmul.f32.gmra.mxu0 %v604
    %v663 = vpop.f32.mrf.mxu0
    %v664 = vadd.f32 %v600, %v663
    %665 = vdwg.mxu0
    %666 = vmatpush.msra.mxu0 0.0
    %667 = vmatpush.msra.mxu0 0.0
    %668 = vmatpush.msra.mxu0 0.0
    %669 = vmatpush.msra.mxu0 0.0
    %670 = vmatpush.msra.mxu0 0.0
    %671 = vmatpush.msra.mxu0 0.0
    %672 = vmatpush.msra.mxu0 0.0
    %673 = vmatpush.msra.mxu0 %v595
    %674 = vmatpush.msra.mxu0 %v591
    %675 = vmatpush.msra.mxu0 %v587
    %676 = vmatpush.msra.mxu0 %v583
    %677 = vmatpush.msra.mxu0 %v579
    %678 = vmatpush.msra.mxu0 %v575
    %679 = vmatpush.msra.mxu0 %v571
    %680 = vmatpush.msra.mxu0 %v567
    %681 = vmatpush.msra.mxu0 %v563
    %682 = vmatmul.f32.gmra.mxu0 %v604
    %v683 = vpop.f32.mrf.mxu0
    %v684 = vadd.f32 %v600, %v683
    %685 = vdwg.mxu0
    %vm686 = vcmp.ge.f32.partialorder %v624, 0.0
    %vm687 = vcmp.ge.f32.partialorder %v644, 0.0
    %vm688 = vcmp.ge.f32.partialorder %v664, 0.0
    %vm689 = vcmp.ge.f32.partialorder %v684, 0.0
    %v690 = vmul.f32 %v624, 0.01
    %v691 = vmul.f32 %v644, 0.01
    %v692 = vmul.f32 %v664, 0.01
    %v693 = vmul.f32 %v684, 0.01
    %v694 = vsel %vm686, %v624, %v690
    %v695 = vsel %vm687, %v644, %v691
    %v696 = vsel %vm688, %v664, %v692
    %v697 = vsel %vm689, %v684, %v693
    %698 = vst [vmem:[#allocation2 + $0x8] sm:$0xff] %v694
    %699 = vst [vmem:[#allocation2 + $0x10] sm:$0xff] %v695
    %700 = vst [vmem:[#allocation2 + $0x20] sm:$0xff] %v696
    %701 = vst [vmem:[#allocation2 + $0x28] sm:$0xff] %v697
    %v702 = vld [vmem:[#allocation2] sm:$0xff]
    %v703 = vld [vmem:[#allocation2 + $0x8] sm:$0xff]
    %v704 = vld [vmem:[#allocation2 + $0x10] sm:$0xff]
    %v705 = vld [vmem:[#allocation7] ss:$8 sm:$0x3]
    %v707 = vperm.slane %v705, 0
    %v708 = vperm.slane %v705, 1
    %709 = vrot.lane.b32.xlu0 %v707, 111
    %v710 = vpop.permute.xlu0 %709
    %711 = vrot.lane.b32.xlu0 %v708, 111
    %v712 = vpop.permute.xlu0 %711
    %v713 = vsel %vm85, %v710, %v712
    %v717 = vmul.f32 %v702, %v710
    %v718 = vmul.f32 %v703, %v713
    %v719 = vmul.f32 %v704, %v712
    %723 = vrot.lane.b32.xlu0 %v717, 17
    %v724 = vpop.permute.xlu0 %723
    %725 = vrot.lane.b32.xlu0 %v718, 17
    %v726 = vpop.permute.xlu0 %725
    %727 = vrot.lane.b32.xlu0 %v719, 17
    %v728 = vpop.permute.xlu0 %727
    %v729 = vsel %vm102, %v724, %v726
    %v730 = vsel %vm102, %v726, %v728
    %733 = vst [vmem:[#allocation3] sm:$0xff] %v729
    %734 = vst [vmem:[#allocation3 + $0x8] sm:$0xff] %v730
    %v735 = vld [vmem:[#allocation2 + $0x18] sm:$0xff]
    %v736 = vld [vmem:[#allocation2 + $0x20] sm:$0xff]
    %v737 = vld [vmem:[#allocation2 + $0x28] sm:$0xff]
    %v738 = vld [vmem:[#allocation7] ss:$8 sm:$0x3]
    %v740 = vperm.slane %v738, 0
    %v741 = vperm.slane %v738, 1
    %742 = vrot.lane.b32.xlu0 %v740, 111
    %v743 = vpop.permute.xlu0 %742
    %744 = vrot.lane.b32.xlu0 %v741, 111
    %v745 = vpop.permute.xlu0 %744
    %v746 = vsel %vm85, %v743, %v745
    %v750 = vmul.f32 %v735, %v743
    %v751 = vmul.f32 %v736, %v746
    %v752 = vmul.f32 %v737, %v745
    %756 = vrot.lane.b32.xlu0 %v750, 17
    %v757 = vpop.permute.xlu0 %756
    %758 = vrot.lane.b32.xlu0 %v751, 17
    %v759 = vpop.permute.xlu0 %758
    %760 = vrot.lane.b32.xlu0 %v752, 17
    %v761 = vpop.permute.xlu0 %760
    %v762 = vsel %vm102, %v757, %v759
    %v763 = vsel %vm102, %v759, %v761
    %766 = vst [vmem:[#allocation3 + $0x10] sm:$0xff] %v762
    %767 = vst [vmem:[#allocation3 + $0x18] sm:$0xff] %v763
    %v768 = vld [vmem:[#allocation2] sm:$0xff]
    %v769 = vld [vmem:[#allocation2 + $0x8] sm:$0xff]
    %v770 = vld [vmem:[#allocation2 + $0x10] sm:$0xff]
    %774 = vrot.lane.b32.xlu0 %v768, 16
    %v775 = vpop.permute.xlu0 %774
    %776 = vrot.lane.b32.xlu0 %v769, 16
    %v777 = vpop.permute.xlu0 %776
    %778 = vrot.lane.b32.xlu0 %v770, 16
    %v779 = vpop.permute.xlu0 %778
    %v780 = vsel %vm154, %v775, %v777
    %v781 = vsel %vm154, %v777, %v779
    %784 = vst [vmem:[#allocation3 + $0x20] sm:$0xff] %v780
    %785 = vst [vmem:[#allocation3 + $0x28] sm:$0xff] %v781
    %v786 = vld [vmem:[#allocation2 + $0x18] sm:$0xff]
    %v787 = vld [vmem:[#allocation2 + $0x20] sm:$0xff]
    %v788 = vld [vmem:[#allocation2 + $0x28] sm:$0xff]
    %792 = vrot.lane.b32.xlu0 %v786, 16
    %v793 = vpop.permute.xlu0 %792
    %794 = vrot.lane.b32.xlu0 %v787, 16
    %v795 = vpop.permute.xlu0 %794
    %796 = vrot.lane.b32.xlu0 %v788, 16
    %v797 = vpop.permute.xlu0 %796
    %v798 = vsel %vm154, %v793, %v795
    %v799 = vsel %vm154, %v795, %v797
    %802 = vst [vmem:[#allocation3 + $0x30] sm:$0xff] %v798
    %803 = vst [vmem:[#allocation3 + $0x38] sm:$0xff] %v799
    %v804 = vld [vmem:[#allocation2] sm:$0xff]
    %v805 = vld [vmem:[#allocation2 + $0x8] sm:$0xff]
    %v806 = vld [vmem:[#allocation2 + $0x10] sm:$0xff]
    %v807 = vld [vmem:[%s182] ss:$8 sm:$0x3]
    %v809 = vperm.slane %v807, 0
    %v810 = vperm.slane %v807, 1
    %811 = vrot.lane.b32.xlu0 %v809, 113
    %v812 = vpop.permute.xlu0 %811
    %813 = vrot.lane.b32.xlu0 %v810, 113
    %v814 = vpop.permute.xlu0 %813
    %v815 = vsel %vm191, %v812, %v814
    %v819 = vmul.f32 %v804, %v812
    %v820 = vmul.f32 %v805, %v815
    %v821 = vmul.f32 %v806, %v814
    %825 = vrot.lane.b32.xlu0 %v819, 15
    %v826 = vpop.permute.xlu0 %825
    %827 = vrot.lane.b32.xlu0 %v820, 15
    %v828 = vpop.permute.xlu0 %827
    %829 = vrot.lane.b32.xlu0 %v821, 15
    %v830 = vpop.permute.xlu0 %829
    %v831 = vsel %vm208, %v826, %v828
    %v832 = vsel %vm208, %v828, %v830
    %835 = vst [vmem:[#allocation3 + $0x40] sm:$0xff] %v831
    %836 = vst [vmem:[#allocation3 + $0x48] sm:$0xff] %v832
    %v837 = vld [vmem:[#allocation2 + $0x18] sm:$0xff]
    %v838 = vld [vmem:[#allocation2 + $0x20] sm:$0xff]
    %v839 = vld [vmem:[#allocation2 + $0x28] sm:$0xff]
    %v840 = vld [vmem:[%s182] ss:$8 sm:$0x3]
    %v842 = vperm.slane %v840, 0
    %v843 = vperm.slane %v840, 1
    %844 = vrot.lane.b32.xlu0 %v842, 113
    %v845 = vpop.permute.xlu0 %844
    %846 = vrot.lane.b32.xlu0 %v843, 113
    %v847 = vpop.permute.xlu0 %846
    %v848 = vsel %vm191, %v845, %v847
    %v852 = vmul.f32 %v837, %v845
    %v853 = vmul.f32 %v838, %v848
    %v854 = vmul.f32 %v839, %v847
    %858 = vrot.lane.b32.xlu0 %v852, 15
    %v859 = vpop.permute.xlu0 %858
    %860 = vrot.lane.b32.xlu0 %v853, 15
    %v861 = vpop.permute.xlu0 %860
    %862 = vrot.lane.b32.xlu0 %v854, 15
    %v863 = vpop.permute.xlu0 %862
    %v864 = vsel %vm208, %v859, %v861
    %v865 = vsel %vm208, %v861, %v863
    %868 = vst [vmem:[#allocation3 + $0x50] sm:$0xff] %v864
    %869 = vst [vmem:[#allocation3 + $0x58] sm:$0xff] %v865
    %v870 = vld [vmem:[#allocation2] sm:$0xff]
    %v871 = vld [vmem:[#allocation2 + $0x8] sm:$0xff]
    %v872 = vld [vmem:[#allocation2 + $0x10] sm:$0xff]
    %v873 = vld [vmem:[#allocation7] ss:$8 sm:$0x3]
    %v875 = vperm.slane %v873, 0
    %v876 = vperm.slane %v873, 1
    %877 = vrot.lane.b32.xlu0 %v875, 127
    %v878 = vpop.permute.xlu0 %877
    %879 = vrot.lane.b32.xlu0 %v876, 127
    %v880 = vpop.permute.xlu0 %879
    %v881 = vsel %vm259, %v878, %v880
    %v885 = vmul.f32 %v870, %v878
    %v886 = vmul.f32 %v871, %v881
    %v887 = vmul.f32 %v872, %v880
    %891 = vrot.lane.b32.xlu0 %v885, 1
    %v892 = vpop.permute.xlu0 %891
    %893 = vrot.lane.b32.xlu0 %v886, 1
    %v894 = vpop.permute.xlu0 %893
    %895 = vrot.lane.b32.xlu0 %v887, 1
    %v896 = vpop.permute.xlu0 %895
    %v897 = vsel %vm276, %v892, %v894
    %v898 = vsel %vm276, %v894, %v896
    %901 = vst [vmem:[#allocation3 + $0x60] sm:$0xff] %v897
    %902 = vst [vmem:[#allocation3 + $0x68] sm:$0xff] %v898
    %v903 = vld [vmem:[#allocation2 + $0x18] sm:$0xff]
    %v904 = vld [vmem:[#allocation2 + $0x20] sm:$0xff]
    %v905 = vld [vmem:[#allocation2 + $0x28] sm:$0xff]
    %v906 = vld [vmem:[#allocation7] ss:$8 sm:$0x3]
    %v908 = vperm.slane %v906, 0
    %v909 = vperm.slane %v906, 1
    %910 = vrot.lane.b32.xlu0 %v908, 127
    %v911 = vpop.permute.xlu0 %910
    %912 = vrot.lane.b32.xlu0 %v909, 127
    %v913 = vpop.permute.xlu0 %912
    %v914 = vsel %vm259, %v911, %v913
    %v918 = vmul.f32 %v903, %v911
    %v919 = vmul.f32 %v904, %v914
    %v920 = vmul.f32 %v905, %v913
    %924 = vrot.lane.b32.xlu0 %v918, 1
    %v925 = vpop.permute.xlu0 %924
    %926 = vrot.lane.b32.xlu0 %v919, 1
    %v927 = vpop.permute.xlu0 %926
    %928 = vrot.lane.b32.xlu0 %v920, 1
    %v929 = vpop.permute.xlu0 %928
    %v930 = vsel %vm276, %v925, %v927
    %v931 = vsel %vm276, %v927, %v929
    %934 = vst [vmem:[#allocation3 + $0x70] sm:$0xff] %v930
    %935 = vst [vmem:[#allocation3 + $0x78] sm:$0xff] %v931
    %v936 = vld [vmem:[#allocation2 + $0x8] sm:$0xff]
    %v937 = vld [vmem:[#allocation2 + $0x10] sm:$0xff]
    %938 = vst [vmem:[#allocation3 + $0x80] sm:$0xff] %v936
    %939 = vst [vmem:[#allocation3 + $0x88] sm:$0xff] %v937
    %v940 = vld [vmem:[#allocation2 + $0x20] sm:$0xff]
    %v941 = vld [vmem:[#allocation2 + $0x28] sm:$0xff]
    %942 = vst [vmem:[#allocation3 + $0x90] sm:$0xff] %v940
    %943 = vst [vmem:[#allocation3 + $0x98] sm:$0xff] %v941
    %v944 = vld [vmem:[#allocation2 + $0x8] sm:$0xff]
    %v945 = vld [vmem:[#allocation2 + $0x10] sm:$0xff]
    %v946 = vld [vmem:[#allocation2 + $0x18] sm:$0xff]
    %v947 = vld [vmem:[%s182] ss:$8 sm:$0x3]
    %v949 = vperm.slane %v947, 0
    %v950 = vperm.slane %v947, 1
    %951 = vrot.lane.b32.xlu0 %v949, 1
    %v952 = vpop.permute.xlu0 %951
    %953 = vrot.lane.b32.xlu0 %v950, 1
    %v954 = vpop.permute.xlu0 %953
    %v955 = vsel %vm276, %v952, %v954
    %v959 = vmul.f32 %v944, %v952
    %v960 = vmul.f32 %v945, %v955
    %v961 = vmul.f32 %v946, %v954
    %965 = vrot.lane.b32.xlu0 %v959, 127
    %v966 = vpop.permute.xlu0 %965
    %967 = vrot.lane.b32.xlu0 %v960, 127
    %v968 = vpop.permute.xlu0 %967
    %969 = vrot.lane.b32.xlu0 %v961, 127
    %v970 = vpop.permute.xlu0 %969
    %v971 = vsel %vm259, %v966, %v968
    %v972 = vsel %vm259, %v968, %v970
    %975 = vst [vmem:[#allocation3 + $0xa0] sm:$0xff] %v971
    %976 = vst [vmem:[#allocation3 + $0xa8] sm:$0xff] %v972
    %v977 = vld [vmem:[#allocation2 + $0x20] sm:$0xff]
    %v978 = vld [vmem:[#allocation2 + $0x28] sm:$0xff]
    %v979 = vld [vmem:[#allocation2 + $0x30] sm:$0xff]
    %v980 = vld [vmem:[%s182] ss:$8 sm:$0x3]
    %v982 = vperm.slane %v980, 0
    %v983 = vperm.slane %v980, 1
    %984 = vrot.lane.b32.xlu0 %v982, 1
    %v985 = vpop.permute.xlu0 %984
    %986 = vrot.lane.b32.xlu0 %v983, 1
    %v987 = vpop.permute.xlu0 %986
    %v988 = vsel %vm276, %v985, %v987
    %v992 = vmul.f32 %v977, %v985
    %v993 = vmul.f32 %v978, %v988
    %v994 = vmul.f32 %v979, %v987
    %998 = vrot.lane.b32.xlu0 %v992, 127
    %v999 = vpop.permute.xlu0 %998
    %1000 = vrot.lane.b32.xlu0 %v993, 127
    %v1001 = vpop.permute.xlu0 %1000
    %1002 = vrot.lane.b32.xlu0 %v994, 127
    %v1003 = vpop.permute.xlu0 %1002
    %v1004 = vsel %vm259, %v999, %v1001
    %v1005 = vsel %vm259, %v1001, %v1003
    %1008 = vst [vmem:[#allocation3 + $0xb0] sm:$0xff] %v1004
    %1009 = vst [vmem:[#allocation3 + $0xb8] sm:$0xff] %v1005
    %v1010 = vld [vmem:[#allocation2 + $0x8] sm:$0xff]
    %v1011 = vld [vmem:[#allocation2 + $0x10] sm:$0xff]
    %v1012 = vld [vmem:[#allocation2 + $0x18] sm:$0xff]
    %v1013 = vld [vmem:[#allocation7] ss:$8 sm:$0x3]
    %v1015 = vperm.slane %v1013, 0
    %v1016 = vperm.slane %v1013, 1
    %1017 = vrot.lane.b32.xlu0 %v1015, 15
    %v1018 = vpop.permute.xlu0 %1017
    %1019 = vrot.lane.b32.xlu0 %v1016, 15
    %v1020 = vpop.permute.xlu0 %1019
    %v1021 = vsel %vm208, %v1018, %v1020
    %v1025 = vmul.f32 %v1010, %v1018
    %v1026 = vmul.f32 %v1011, %v1021
    %v1027 = vmul.f32 %v1012, %v1020
    %1031 = vrot.lane.b32.xlu0 %v1025, 113
    %v1032 = vpop.permute.xlu0 %1031
    %1033 = vrot.lane.b32.xlu0 %v1026, 113
    %v1034 = vpop.permute.xlu0 %1033
    %1035 = vrot.lane.b32.xlu0 %v1027, 113
    %v1036 = vpop.permute.xlu0 %1035
    %v1037 = vsel %vm191, %v1032, %v1034
    %v1038 = vsel %vm191, %v1034, %v1036
    %1041 = vst [vmem:[#allocation3 + $0xc0] sm:$0xff] %v1037
    %1042 = vst [vmem:[#allocation3 + $0xc8] sm:$0xff] %v1038
    %v1043 = vld [vmem:[#allocation2 + $0x20] sm:$0xff]
    %v1044 = vld [vmem:[#allocation2 + $0x28] sm:$0xff]
    %v1045 = vld [vmem:[#allocation2 + $0x30] sm:$0xff]
    %v1046 = vld [vmem:[#allocation7] ss:$8 sm:$0x3]
    %v1048 = vperm.slane %v1046, 0
    %v1049 = vperm.slane %v1046, 1
    %1050 = vrot.lane.b32.xlu0 %v1048, 15
    %v1051 = vpop.permute.xlu0 %1050
    %1052 = vrot.lane.b32.xlu0 %v1049, 15
    %v1053 = vpop.permute.xlu0 %1052
    %v1054 = vsel %vm208, %v1051, %v1053
    %v1058 = vmul.f32 %v1043, %v1051
    %v1059 = vmul.f32 %v1044, %v1054
    %v1060 = vmul.f32 %v1045, %v1053
    %1064 = vrot.lane.b32.xlu0 %v1058, 113
    %v1065 = vpop.permute.xlu0 %1064
    %1066 = vrot.lane.b32.xlu0 %v1059, 113
    %v1067 = vpop.permute.xlu0 %1066
    %1068 = vrot.lane.b32.xlu0 %v1060, 113
    %v1069 = vpop.permute.xlu0 %1068
    %v1070 = vsel %vm191, %v1065, %v1067
    %v1071 = vsel %vm191, %v1067, %v1069
    %1074 = vst [vmem:[#allocation3 + $0xd0] sm:$0xff] %v1070
    %1075 = vst [vmem:[#allocation3 + $0xd8] sm:$0xff] %v1071
    %v1076 = vld [vmem:[#allocation2 + $0x8] sm:$0xff]
    %v1077 = vld [vmem:[#allocation2 + $0x10] sm:$0xff]
    %v1078 = vld [vmem:[#allocation2 + $0x18] sm:$0xff]
    %1082 = vrot.lane.b32.xlu0 %v1076, 112
    %v1083 = vpop.permute.xlu0 %1082
    %1084 = vrot.lane.b32.xlu0 %v1077, 112
    %v1085 = vpop.permute.xlu0 %1084
    %1086 = vrot.lane.b32.xlu0 %v1078, 112
    %v1087 = vpop.permute.xlu0 %1086
    %v1088 = vsel %vm468, %v1083, %v1085
    %v1089 = vsel %vm468, %v1085, %v1087
    %1092 = vst [vmem:[#allocation3 + $0xe0] sm:$0xff] %v1088
    %1093 = vst [vmem:[#allocation3 + $0xe8] sm:$0xff] %v1089
    %v1094 = vld [vmem:[#allocation2 + $0x20] sm:$0xff]
    %v1095 = vld [vmem:[#allocation2 + $0x28] sm:$0xff]
    %v1096 = vld [vmem:[#allocation2 + $0x30] sm:$0xff]
    %1100 = vrot.lane.b32.xlu0 %v1094, 112
    %v1101 = vpop.permute.xlu0 %1100
    %1102 = vrot.lane.b32.xlu0 %v1095, 112
    %v1103 = vpop.permute.xlu0 %1102
    %1104 = vrot.lane.b32.xlu0 %v1096, 112
    %v1105 = vpop.permute.xlu0 %1104
    %v1106 = vsel %vm468, %v1101, %v1103
    %v1107 = vsel %vm468, %v1103, %v1105
    %1110 = vst [vmem:[#allocation3 + $0xf0] sm:$0xff] %v1106
    %1111 = vst [vmem:[#allocation3 + $0xf8] sm:$0xff] %v1107
    %v1112 = vld [vmem:[#allocation2 + $0x8] sm:$0xff]
    %v1113 = vld [vmem:[#allocation2 + $0x10] sm:$0xff]
    %v1114 = vld [vmem:[#allocation2 + $0x18] sm:$0xff]
    %v1115 = vld [vmem:[%s182] ss:$8 sm:$0x3]
    %v1117 = vperm.slane %v1115, 0
    %v1118 = vperm.slane %v1115, 1
    %1119 = vrot.lane.b32.xlu0 %v1117, 17
    %v1120 = vpop.permute.xlu0 %1119
    %1121 = vrot.lane.b32.xlu0 %v1118, 17
    %v1122 = vpop.permute.xlu0 %1121
    %v1123 = vsel %vm102, %v1120, %v1122
    %v1127 = vmul.f32 %v1112, %v1120
    %v1128 = vmul.f32 %v1113, %v1123
    %v1129 = vmul.f32 %v1114, %v1122
    %1133 = vrot.lane.b32.xlu0 %v1127, 111
    %v1134 = vpop.permute.xlu0 %1133
    %1135 = vrot.lane.b32.xlu0 %v1128, 111
    %v1136 = vpop.permute.xlu0 %1135
    %1137 = vrot.lane.b32.xlu0 %v1129, 111
    %v1138 = vpop.permute.xlu0 %1137
    %v1139 = vsel %vm85, %v1134, %v1136
    %v1140 = vsel %vm85, %v1136, %v1138
    %1143 = vst [vmem:[#allocation3 + $0x100] sm:$0xff] %v1139
    %1144 = vst [vmem:[#allocation3 + $0x108] sm:$0xff] %v1140
    %v1145 = vld [vmem:[#allocation2 + $0x20] sm:$0xff]
    %v1146 = vld [vmem:[#allocation2 + $0x28] sm:$0xff]
    %v1147 = vld [vmem:[#allocation2 + $0x30] sm:$0xff]
    %v1148 = vld [vmem:[%s182] ss:$8 sm:$0x3]
    %v1150 = vperm.slane %v1148, 0
    %v1151 = vperm.slane %v1148, 1
    %1152 = vrot.lane.b32.xlu0 %v1150, 17
    %v1153 = vpop.permute.xlu0 %1152
    %1154 = vrot.lane.b32.xlu0 %v1151, 17
    %v1155 = vpop.permute.xlu0 %1154
    %v1156 = vsel %vm102, %v1153, %v1155
    %v1160 = vmul.f32 %v1145, %v1153
    %v1161 = vmul.f32 %v1146, %v1156
    %v1162 = vmul.f32 %v1147, %v1155
    %1166 = vrot.lane.b32.xlu0 %v1160, 111
    %v1167 = vpop.permute.xlu0 %1166
    %1168 = vrot.lane.b32.xlu0 %v1161, 111
    %v1169 = vpop.permute.xlu0 %1168
    %1170 = vrot.lane.b32.xlu0 %v1162, 111
    %v1171 = vpop.permute.xlu0 %1170
    %v1172 = vsel %vm85, %v1167, %v1169
    %v1173 = vsel %vm85, %v1169, %v1171
    %1176 = vst [vmem:[#allocation3 + $0x110] sm:$0xff] %v1172
    %1177 = vst [vmem:[#allocation3 + $0x118] sm:$0xff] %v1173
    %v1178 = vld [vmem:[%s1 + $0x8] sm:$0xff]
    %v1179 = vld [vmem:[#allocation3] sm:$0xff]
    %v1180 = vld [vmem:[#allocation3 + $0x8] sm:$0xff]
    %v1181 = vld [vmem:[#allocation3 + $0x10] sm:$0xff]
    %v1182 = vld [vmem:[#allocation3 + $0x18] sm:$0xff]
    %v1183 = vld [vmem:[#allocation3 + $0x20] sm:$0xff]
    %v1184 = vld [vmem:[#allocation3 + $0x28] sm:$0xff]
    %v1185 = vld [vmem:[#allocation3 + $0x30] sm:$0xff]
    %v1186 = vld [vmem:[#allocation3 + $0x38] sm:$0xff]
    %v1187 = vld [vmem:[#allocation3 + $0x40] sm:$0xff]
    %v1188 = vld [vmem:[#allocation3 + $0x48] sm:$0xff]
    %v1189 = vld [vmem:[#allocation3 + $0x50] sm:$0xff]
    %v1190 = vld [vmem:[#allocation3 + $0x58] sm:$0xff]
    %v1191 = vld [vmem:[#allocation3 + $0x60] sm:$0xff]
    %v1192 = vld [vmem:[#allocation3 + $0x68] sm:$0xff]
    %v1193 = vld [vmem:[#allocation3 + $0x70] sm:$0xff]
    %v1194 = vld [vmem:[#allocation3 + $0x78] sm:$0xff]
    %v1195 = vld [vmem:[#allocation3 + $0x80] sm:$0xff]
    %v1196 = vld [vmem:[#allocation3 + $0x88] sm:$0xff]
    %v1197 = vld [vmem:[#allocation3 + $0x90] sm:$0xff]
    %v1198 = vld [vmem:[#allocation3 + $0x98] sm:$0xff]
    %v1199 = vld [vmem:[#allocation3 + $0xa0] sm:$0xff]
    %v1200 = vld [vmem:[#allocation3 + $0xa8] sm:$0xff]
    %v1201 = vld [vmem:[#allocation3 + $0xb0] sm:$0xff]
    %v1202 = vld [vmem:[#allocation3 + $0xb8] sm:$0xff]
    %v1203 = vld [vmem:[#allocation3 + $0xc0] sm:$0xff]
    %v1204 = vld [vmem:[#allocation3 + $0xc8] sm:$0xff]
    %v1205 = vld [vmem:[#allocation3 + $0xd0] sm:$0xff]
    %v1206 = vld [vmem:[#allocation3 + $0xd8] sm:$0xff]
    %v1207 = vld [vmem:[#allocation3 + $0xe0] sm:$0xff]
    %v1208 = vld [vmem:[#allocation3 + $0xe8] sm:$0xff]
    %v1209 = vld [vmem:[#allocation3 + $0xf0] sm:$0xff]
    %v1210 = vld [vmem:[#allocation3 + $0xf8] sm:$0xff]
    %v1211 = vld [vmem:[#allocation3 + $0x100] sm:$0xff]
    %v1212 = vld [vmem:[#allocation3 + $0x108] sm:$0xff]
    %v1213 = vld [vmem:[#allocation3 + $0x110] sm:$0xff]
    %v1214 = vld [vmem:[#allocation3 + $0x118] sm:$0xff]
    %v1215 = vld [vmem:[%s2 + $0x8] sm:$0xff]
    %1217 = vset.pattern.permute.xlu0 0
    %1218 = vperm.xlu0 %1217, %v1215
    %v1219 = vpop.permute.xlu0 %1218
    %v1222 = vsel %vm602, %v1178, 0
    %1224 = vmatpush.msra.mxu0 0.0
    %1225 = vmatpush.msra.mxu0 0.0
    %1226 = vmatpush.msra.mxu0 0.0
    %1227 = vmatpush.msra.mxu0 0.0
    %1228 = vmatpush.msra.mxu0 0.0
    %1229 = vmatpush.msra.mxu0 0.0
    %1230 = vmatpush.msra.mxu0 0.0
    %1231 = vmatpush.msra.mxu0 %v1211
    %1232 = vmatpush.msra.mxu0 %v1207
    %1233 = vmatpush.msra.mxu0 %v1203
    %1234 = vmatpush.msra.mxu0 %v1199
    %1235 = vmatpush.msra.mxu0 %v1195
    %1236 = vmatpush.msra.mxu0 %v1191
    %1237 = vmatpush.msra.mxu0 %v1187
    %1238 = vmatpush.msra.mxu0 %v1183
    %1239 = vmatpush.msra.mxu0 %v1179
    %1240 = vmatmul.f32.gmra.mxu0 %v1222
    %v1241 = vpop.f32.mrf.mxu0
    %v1242 = vadd.f32 %v1219, %v1241
    %1243 = vdwg.mxu0
    %1244 = vmatpush.msra.mxu0 0.0
    %1245 = vmatpush.msra.mxu0 0.0
    %1246 = vmatpush.msra.mxu0 0.0
    %1247 = vmatpush.msra.mxu0 0.0
    %1248 = vmatpush.msra.mxu0 0.0
    %1249 = vmatpush.msra.mxu0 0.0
    %1250 = vmatpush.msra.mxu0 0.0
    %1251 = vmatpush.msra.mxu0 %v1212
    %1252 = vmatpush.msra.mxu0 %v1208
    %1253 = vmatpush.msra.mxu0 %v1204
    %1254 = vmatpush.msra.mxu0 %v1200
    %1255 = vmatpush.msra.mxu0 %v1196
    %1256 = vmatpush.msra.mxu0 %v1192
    %1257 = vmatpush.msra.mxu0 %v1188
    %1258 = vmatpush.msra.mxu0 %v1184
    %1259 = vmatpush.msra.mxu0 %v1180
    %1260 = vmatmul.f32.gmra.mxu0 %v1222
    %v1261 = vpop.f32.mrf.mxu0
    %v1262 = vadd.f32 %v1219, %v1261
    %1263 = vdwg.mxu0
    %1264 = vmatpush.msra.mxu0 0.0
    %1265 = vmatpush.msra.mxu0 0.0
    %1266 = vmatpush.msra.mxu0 0.0
    %1267 = vmatpush.msra.mxu0 0.0
    %1268 = vmatpush.msra.mxu0 0.0
    %1269 = vmatpush.msra.mxu0 0.0
    %1270 = vmatpush.msra.mxu0 0.0
    %1271 = vmatpush.msra.mxu0 %v1213
    %1272 = vmatpush.msra.mxu0 %v1209
    %1273 = vmatpush.msra.mxu0 %v1205
    %1274 = vmatpush.msra.mxu0 %v1201
    %1275 = vmatpush.msra.mxu0 %v1197
    %1276 = vmatpush.msra.mxu0 %v1193
    %1277 = vmatpush.msra.mxu0 %v1189
    %1278 = vmatpush.msra.mxu0 %v1185
    %1279 = vmatpush.msra.mxu0 %v1181
    %1280 = vmatmul.f32.gmra.mxu0 %v1222
    %v1281 = vpop.f32.mrf.mxu0
    %v1282 = vadd.f32 %v1219, %v1281
    %1283 = vdwg.mxu0
    %1284 = vmatpush.msra.mxu0 0.0
    %1285 = vmatpush.msra.mxu0 0.0
    %1286 = vmatpush.msra.mxu0 0.0
    %1287 = vmatpush.msra.mxu0 0.0
    %1288 = vmatpush.msra.mxu0 0.0
    %1289 = vmatpush.msra.mxu0 0.0
    %1290 = vmatpush.msra.mxu0 0.0
    %1291 = vmatpush.msra.mxu0 %v1214
    %1292 = vmatpush.msra.mxu0 %v1210
    %1293 = vmatpush.msra.mxu0 %v1206
    %1294 = vmatpush.msra.mxu0 %v1202
    %1295 = vmatpush.msra.mxu0 %v1198
    %1296 = vmatpush.msra.mxu0 %v1194
    %1297 = vmatpush.msra.mxu0 %v1190
    %1298 = vmatpush.msra.mxu0 %v1186
    %1299 = vmatpush.msra.mxu0 %v1182
    %1300 = vmatmul.f32.gmra.mxu0 %v1222
    %v1301 = vpop.f32.mrf.mxu0
    %v1302 = vadd.f32 %v1219, %v1301
    %1303 = vdwg.mxu0
    %vm1304 = vcmp.ge.f32.partialorder %v1242, 0.0
    %vm1305 = vcmp.ge.f32.partialorder %v1262, 0.0
    %vm1306 = vcmp.ge.f32.partialorder %v1282, 0.0
    %vm1307 = vcmp.ge.f32.partialorder %v1302, 0.0
    %v1308 = vmul.f32 %v1242, 0.01
    %v1309 = vmul.f32 %v1262, 0.01
    %v1310 = vmul.f32 %v1282, 0.01
    %v1311 = vmul.f32 %v1302, 0.01
    %v1312 = vsel %vm1304, %v1242, %v1308
    %v1313 = vsel %vm1305, %v1262, %v1309
    %v1314 = vsel %vm1306, %v1282, %v1310
    %v1315 = vsel %vm1307, %v1302, %v1311
    %v1316 = vld [vmem:[%s1 + $0x14] sm:$0xff]
    %v1317 = vld [vmem:[%s2 + $0x14] sm:$0xff]
    %1319 = vset.pattern.permute.xlu0 0
    %1320 = vperm.xlu0 %1319, %v1317
    %v1321 = vpop.permute.xlu0 %1320
    %vm1323 = vcmask 64512
    %v1325 = vsel %vm1323, %v1316, 0
    %1327 = vmatpush.msra.mxu0 0.0
    %1328 = vmatpush.msra.mxu0 0.0
    %1329 = vmatpush.msra.mxu0 0.0
    %1330 = vmatpush.msra.mxu0 0.0
    %1331 = vmatpush.msra.mxu0 0.0
    %1332 = vmatpush.msra.mxu0 0.0
    %1333 = vmatpush.msra.mxu0 0.0
    %1334 = vmatpush.msra.mxu0 0.0
    %1335 = vmatpush.msra.mxu0 0.0
    %1336 = vmatpush.msra.mxu0 0.0
    %1337 = vmatpush.msra.mxu0 0.0
    %1338 = vmatpush.msra.mxu0 0.0
    %1339 = vmatpush.msra.mxu0 0.0
    %1340 = vmatpush.msra.mxu0 0.0
    %1341 = vmatpush.msra.mxu0 0.0
    %1342 = vmatpush.msra.mxu0 %v1312
    %1343 = vmatmul.f32.gmra.mxu0 %v1325
    %v1344 = vpop.f32.mrf.mxu0
    %v1345 = vadd.f32 %v1321, %v1344
    %1346 = vdwg.mxu0
    %1347 = vmatpush.msra.mxu0 0.0
    %1348 = vmatpush.msra.mxu0 0.0
    %1349 = vmatpush.msra.mxu0 0.0
    %1350 = vmatpush.msra.mxu0 0.0
    %1351 = vmatpush.msra.mxu0 0.0
    %1352 = vmatpush.msra.mxu0 0.0
    %1353 = vmatpush.msra.mxu0 0.0
    %1354 = vmatpush.msra.mxu0 0.0
    %1355 = vmatpush.msra.mxu0 0.0
    %1356 = vmatpush.msra.mxu0 0.0
    %1357 = vmatpush.msra.mxu0 0.0
    %1358 = vmatpush.msra.mxu0 0.0
    %1359 = vmatpush.msra.mxu0 0.0
    %1360 = vmatpush.msra.mxu0 0.0
    %1361 = vmatpush.msra.mxu0 0.0
    %1362 = vmatpush.msra.mxu0 %v1313
    %1363 = vmatmul.f32.gmra.mxu0 %v1325
    %v1364 = vpop.f32.mrf.mxu0
    %v1365 = vadd.f32 %v1321, %v1364
    %1366 = vdwg.mxu0
    %1367 = vmatpush.msra.mxu0 0.0
    %1368 = vmatpush.msra.mxu0 0.0
    %1369 = vmatpush.msra.mxu0 0.0
    %1370 = vmatpush.msra.mxu0 0.0
    %1371 = vmatpush.msra.mxu0 0.0
    %1372 = vmatpush.msra.mxu0 0.0
    %1373 = vmatpush.msra.mxu0 0.0
    %1374 = vmatpush.msra.mxu0 0.0
    %1375 = vmatpush.msra.mxu0 0.0
    %1376 = vmatpush.msra.mxu0 0.0
    %1377 = vmatpush.msra.mxu0 0.0
    %1378 = vmatpush.msra.mxu0 0.0
    %1379 = vmatpush.msra.mxu0 0.0
    %1380 = vmatpush.msra.mxu0 0.0
    %1381 = vmatpush.msra.mxu0 0.0
    %1382 = vmatpush.msra.mxu0 %v1314
    %1383 = vmatmul.f32.gmra.mxu0 %v1325
    %v1384 = vpop.f32.mrf.mxu0
    %v1385 = vadd.f32 %v1321, %v1384
    %1386 = vdwg.mxu0
    %1387 = vmatpush.msra.mxu0 0.0
    %1388 = vmatpush.msra.mxu0 0.0
    %1389 = vmatpush.msra.mxu0 0.0
    %1390 = vmatpush.msra.mxu0 0.0
    %1391 = vmatpush.msra.mxu0 0.0
    %1392 = vmatpush.msra.mxu0 0.0
    %1393 = vmatpush.msra.mxu0 0.0
    %1394 = vmatpush.msra.mxu0 0.0
    %1395 = vmatpush.msra.mxu0 0.0
    %1396 = vmatpush.msra.mxu0 0.0
    %1397 = vmatpush.msra.mxu0 0.0
    %1398 = vmatpush.msra.mxu0 0.0
    %1399 = vmatpush.msra.mxu0 0.0
    %1400 = vmatpush.msra.mxu0 0.0
    %1401 = vmatpush.msra.mxu0 0.0
    %1402 = vmatpush.msra.mxu0 %v1315
    %1403 = vmatmul.f32.gmra.mxu0 %v1325
    %v1404 = vpop.f32.mrf.mxu0
    %v1405 = vadd.f32 %v1321, %v1404
    %1406 = vdwg.mxu0
    %vm1407 = vcmp.ge.f32.partialorder %v1345, 0.0
    %vm1408 = vcmp.ge.f32.partialorder %v1365, 0.0
    %vm1409 = vcmp.ge.f32.partialorder %v1385, 0.0
    %vm1410 = vcmp.ge.f32.partialorder %v1405, 0.0
    %v1411 = vmul.f32 %v1345, 0.01
    %v1412 = vmul.f32 %v1365, 0.01
    %v1413 = vmul.f32 %v1385, 0.01
    %v1414 = vmul.f32 %v1405, 0.01
    %v1415 = vsel %vm1407, %v1345, %v1411
    %v1416 = vsel %vm1408, %v1365, %v1412
    %v1417 = vsel %vm1409, %v1385, %v1413
    %v1418 = vsel %vm1410, %v1405, %v1414
    %v1421 = vrot.slane %v1415, 4
    %v1422 = vrot.slane %v1416, 4
    %v1425 = vadd.f32 %v1415, %v1421
    %v1426 = vadd.f32 %v1416, %v1422
    %v1427 = vld [vmem:[#allocation4] sm:$0xff]
    %1429 = vst [vmem:[#allocation1] ss:$2 sm:$0xff] %v1427
    %v1430 = vld.sshfl [vmem:[#allocation1] sm:$0xff pattern:$0x75316420]
    %v1431 = vld.sshfl [vmem:[#allocation1 + $0x8] sm:$0xff pattern:$0x75316420]
    %v1434 = vadd.f32 %v1425, %v1430
    %v1435 = vadd.f32 %v1426, %v1431
    %1436 = vst [vmem:[#allocation2 + $0x8] sm:$0xf] %v1434
    %1437 = vst [vmem:[#allocation2 + $0x10] sm:$0xf] %v1435
    %v1440 = vrot.slane %v1417, 4
    %v1441 = vrot.slane %v1418, 4
    %v1444 = vadd.f32 %v1417, %v1440
    %v1445 = vadd.f32 %v1418, %v1441
    %v1446 = vld [vmem:[%s64] sm:$0xff]
    %1448 = vst [vmem:[#allocation1] ss:$2 sm:$0xff] %v1446
    %v1449 = vld.sshfl [vmem:[#allocation1] sm:$0xff pattern:$0x75316420]
    %v1450 = vld.sshfl [vmem:[#allocation1 + $0x8] sm:$0xff pattern:$0x75316420]
    %v1453 = vadd.f32 %v1444, %v1449
    %v1454 = vadd.f32 %v1445, %v1450
    %1455 = vst [vmem:[#allocation2 + $0x20] sm:$0xf] %v1453
    %1456 = vst [vmem:[#allocation2 + $0x28] sm:$0xf] %v1454
    %v1457 = vld [vmem:[#allocation2] sm:$0xff]
    %v1458 = vld [vmem:[#allocation2 + $0x8] sm:$0xff]
    %v1459 = vld [vmem:[#allocation2 + $0x10] sm:$0xff]
    %v1460 = vld [vmem:[#allocation7] ss:$8 sm:$0x3]
    %v1462 = vperm.slane %v1460, 0
    %v1463 = vperm.slane %v1460, 1
    %1464 = vrot.lane.b32.xlu0 %v1462, 111
    %v1465 = vpop.permute.xlu0 %1464
    %1466 = vrot.lane.b32.xlu0 %v1463, 111
    %v1467 = vpop.permute.xlu0 %1466
    %v1468 = vsel %vm85, %v1465, %v1467
    %v1472 = vmul.f32 %v1457, %v1465
    %v1473 = vmul.f32 %v1458, %v1468
    %v1474 = vmul.f32 %v1459, %v1467
    %1478 = vrot.lane.b32.xlu0 %v1472, 17
    %v1479 = vpop.permute.xlu0 %1478
    %1480 = vrot.lane.b32.xlu0 %v1473, 17
    %v1481 = vpop.permute.xlu0 %1480
    %1482 = vrot.lane.b32.xlu0 %v1474, 17
    %v1483 = vpop.permute.xlu0 %1482
    %v1484 = vsel %vm102, %v1479, %v1481
    %v1485 = vsel %vm102, %v1481, %v1483
    %1488 = vst [vmem:[#allocation3] sm:$0xff] %v1484
    %1489 = vst [vmem:[#allocation3 + $0x8] sm:$0xff] %v1485
    %v1490 = vld [vmem:[#allocation2 + $0x18] sm:$0xff]
    %v1491 = vld [vmem:[#allocation2 + $0x20] sm:$0xff]
    %v1492 = vld [vmem:[#allocation2 + $0x28] sm:$0xff]
    %v1493 = vld [vmem:[#allocation7] ss:$8 sm:$0x3]
    %v1495 = vperm.slane %v1493, 0
    %v1496 = vperm.slane %v1493, 1
    %1497 = vrot.lane.b32.xlu0 %v1495, 111
    %v1498 = vpop.permute.xlu0 %1497
    %1499 = vrot.lane.b32.xlu0 %v1496, 111
    %v1500 = vpop.permute.xlu0 %1499
    %v1501 = vsel %vm85, %v1498, %v1500
    %v1505 = vmul.f32 %v1490, %v1498
    %v1506 = vmul.f32 %v1491, %v1501
    %v1507 = vmul.f32 %v1492, %v1500
    %1511 = vrot.lane.b32.xlu0 %v1505, 17
    %v1512 = vpop.permute.xlu0 %1511
    %1513 = vrot.lane.b32.xlu0 %v1506, 17
    %v1514 = vpop.permute.xlu0 %1513
    %1515 = vrot.lane.b32.xlu0 %v1507, 17
    %v1516 = vpop.permute.xlu0 %1515
    %v1517 = vsel %vm102, %v1512, %v1514
    %v1518 = vsel %vm102, %v1514, %v1516
    %1521 = vst [vmem:[#allocation3 + $0x10] sm:$0xff] %v1517
    %1522 = vst [vmem:[#allocation3 + $0x18] sm:$0xff] %v1518
    %v1523 = vld [vmem:[#allocation2] sm:$0xff]
    %v1524 = vld [vmem:[#allocation2 + $0x8] sm:$0xff]
    %v1525 = vld [vmem:[#allocation2 + $0x10] sm:$0xff]
    %1529 = vrot.lane.b32.xlu0 %v1523, 16
    %v1530 = vpop.permute.xlu0 %1529
    %1531 = vrot.lane.b32.xlu0 %v1524, 16
    %v1532 = vpop.permute.xlu0 %1531
    %1533 = vrot.lane.b32.xlu0 %v1525, 16
    %v1534 = vpop.permute.xlu0 %1533
    %v1535 = vsel %vm154, %v1530, %v1532
    %v1536 = vsel %vm154, %v1532, %v1534
    %1539 = vst [vmem:[#allocation3 + $0x20] sm:$0xff] %v1535
    %1540 = vst [vmem:[#allocation3 + $0x28] sm:$0xff] %v1536
    %v1541 = vld [vmem:[#allocation2 + $0x18] sm:$0xff]
    %v1542 = vld [vmem:[#allocation2 + $0x20] sm:$0xff]
    %v1543 = vld [vmem:[#allocation2 + $0x28] sm:$0xff]
    %1547 = vrot.lane.b32.xlu0 %v1541, 16
    %v1548 = vpop.permute.xlu0 %1547
    %1549 = vrot.lane.b32.xlu0 %v1542, 16
    %v1550 = vpop.permute.xlu0 %1549
    %1551 = vrot.lane.b32.xlu0 %v1543, 16
    %v1552 = vpop.permute.xlu0 %1551
    %v1553 = vsel %vm154, %v1548, %v1550
    %v1554 = vsel %vm154, %v1550, %v1552
    %1557 = vst [vmem:[#allocation3 + $0x30] sm:$0xff] %v1553
    %1558 = vst [vmem:[#allocation3 + $0x38] sm:$0xff] %v1554
    %v1559 = vld [vmem:[#allocation2] sm:$0xff]
    %v1560 = vld [vmem:[#allocation2 + $0x8] sm:$0xff]
    %v1561 = vld [vmem:[#allocation2 + $0x10] sm:$0xff]
    %v1562 = vld [vmem:[%s182] ss:$8 sm:$0x3]
    %v1564 = vperm.slane %v1562, 0
    %v1565 = vperm.slane %v1562, 1
    %1566 = vrot.lane.b32.xlu0 %v1564, 113
    %v1567 = vpop.permute.xlu0 %1566
    %1568 = vrot.lane.b32.xlu0 %v1565, 113
    %v1569 = vpop.permute.xlu0 %1568
    %v1570 = vsel %vm191, %v1567, %v1569
    %v1574 = vmul.f32 %v1559, %v1567
    %v1575 = vmul.f32 %v1560, %v1570
    %v1576 = vmul.f32 %v1561, %v1569
    %1580 = vrot.lane.b32.xlu0 %v1574, 15
    %v1581 = vpop.permute.xlu0 %1580
    %1582 = vrot.lane.b32.xlu0 %v1575, 15
    %v1583 = vpop.permute.xlu0 %1582
    %1584 = vrot.lane.b32.xlu0 %v1576, 15
    %v1585 = vpop.permute.xlu0 %1584
    %v1586 = vsel %vm208, %v1581, %v1583
    %v1587 = vsel %vm208, %v1583, %v1585
    %1590 = vst [vmem:[#allocation3 + $0x40] sm:$0xff] %v1586
    %1591 = vst [vmem:[#allocation3 + $0x48] sm:$0xff] %v1587
    %v1592 = vld [vmem:[#allocation2 + $0x18] sm:$0xff]
    %v1593 = vld [vmem:[#allocation2 + $0x20] sm:$0xff]
    %v1594 = vld [vmem:[#allocation2 + $0x28] sm:$0xff]
    %v1595 = vld [vmem:[%s182] ss:$8 sm:$0x3]
    %v1597 = vperm.slane %v1595, 0
    %v1598 = vperm.slane %v1595, 1
    %1599 = vrot.lane.b32.xlu0 %v1597, 113
    %v1600 = vpop.permute.xlu0 %1599
    %1601 = vrot.lane.b32.xlu0 %v1598, 113
    %v1602 = vpop.permute.xlu0 %1601
    %v1603 = vsel %vm191, %v1600, %v1602
    %v1607 = vmul.f32 %v1592, %v1600
    %v1608 = vmul.f32 %v1593, %v1603
    %v1609 = vmul.f32 %v1594, %v1602
    %1613 = vrot.lane.b32.xlu0 %v1607, 15
    %v1614 = vpop.permute.xlu0 %1613
    %1615 = vrot.lane.b32.xlu0 %v1608, 15
    %v1616 = vpop.permute.xlu0 %1615
    %1617 = vrot.lane.b32.xlu0 %v1609, 15
    %v1618 = vpop.permute.xlu0 %1617
    %v1619 = vsel %vm208, %v1614, %v1616
    %v1620 = vsel %vm208, %v1616, %v1618
    %1623 = vst [vmem:[#allocation3 + $0x50] sm:$0xff] %v1619
    %1624 = vst [vmem:[#allocation3 + $0x58] sm:$0xff] %v1620
    %v1625 = vld [vmem:[#allocation2] sm:$0xff]
    %v1626 = vld [vmem:[#allocation2 + $0x8] sm:$0xff]
    %v1627 = vld [vmem:[#allocation2 + $0x10] sm:$0xff]
    %v1628 = vld [vmem:[#allocation7] ss:$8 sm:$0x3]
    %v1630 = vperm.slane %v1628, 0
    %v1631 = vperm.slane %v1628, 1
    %1632 = vrot.lane.b32.xlu0 %v1630, 127
    %v1633 = vpop.permute.xlu0 %1632
    %1634 = vrot.lane.b32.xlu0 %v1631, 127
    %v1635 = vpop.permute.xlu0 %1634
    %v1636 = vsel %vm259, %v1633, %v1635
    %v1640 = vmul.f32 %v1625, %v1633
    %v1641 = vmul.f32 %v1626, %v1636
    %v1642 = vmul.f32 %v1627, %v1635
    %1646 = vrot.lane.b32.xlu0 %v1640, 1
    %v1647 = vpop.permute.xlu0 %1646
    %1648 = vrot.lane.b32.xlu0 %v1641, 1
    %v1649 = vpop.permute.xlu0 %1648
    %1650 = vrot.lane.b32.xlu0 %v1642, 1
    %v1651 = vpop.permute.xlu0 %1650
    %v1652 = vsel %vm276, %v1647, %v1649
    %v1653 = vsel %vm276, %v1649, %v1651
    %1656 = vst [vmem:[#allocation3 + $0x60] sm:$0xff] %v1652
    %1657 = vst [vmem:[#allocation3 + $0x68] sm:$0xff] %v1653
    %v1658 = vld [vmem:[#allocation2 + $0x18] sm:$0xff]
    %v1659 = vld [vmem:[#allocation2 + $0x20] sm:$0xff]
    %v1660 = vld [vmem:[#allocation2 + $0x28] sm:$0xff]
    %v1661 = vld [vmem:[#allocation7] ss:$8 sm:$0x3]
    %v1663 = vperm.slane %v1661, 0
    %v1664 = vperm.slane %v1661, 1
    %1665 = vrot.lane.b32.xlu0 %v1663, 127
    %v1666 = vpop.permute.xlu0 %1665
    %1667 = vrot.lane.b32.xlu0 %v1664, 127
    %v1668 = vpop.permute.xlu0 %1667
    %v1669 = vsel %vm259, %v1666, %v1668
    %v1673 = vmul.f32 %v1658, %v1666
    %v1674 = vmul.f32 %v1659, %v1669
    %v1675 = vmul.f32 %v1660, %v1668
    %1679 = vrot.lane.b32.xlu0 %v1673, 1
    %v1680 = vpop.permute.xlu0 %1679
    %1681 = vrot.lane.b32.xlu0 %v1674, 1
    %v1682 = vpop.permute.xlu0 %1681
    %1683 = vrot.lane.b32.xlu0 %v1675, 1
    %v1684 = vpop.permute.xlu0 %1683
    %v1685 = vsel %vm276, %v1680, %v1682
    %v1686 = vsel %vm276, %v1682, %v1684
    %1689 = vst [vmem:[#allocation3 + $0x70] sm:$0xff] %v1685
    %1690 = vst [vmem:[#allocation3 + $0x78] sm:$0xff] %v1686
    %v1691 = vld [vmem:[#allocation2 + $0x8] sm:$0xff]
    %v1692 = vld [vmem:[#allocation2 + $0x10] sm:$0xff]
    %1693 = vst [vmem:[#allocation3 + $0x80] sm:$0xff] %v1691
    %1694 = vst [vmem:[#allocation3 + $0x88] sm:$0xff] %v1692
    %v1695 = vld [vmem:[#allocation2 + $0x20] sm:$0xff]
    %v1696 = vld [vmem:[#allocation2 + $0x28] sm:$0xff]
    %1697 = vst [vmem:[#allocation3 + $0x90] sm:$0xff] %v1695
    %1698 = vst [vmem:[#allocation3 + $0x98] sm:$0xff] %v1696
    %v1699 = vld [vmem:[#allocation2 + $0x8] sm:$0xff]
    %v1700 = vld [vmem:[#allocation2 + $0x10] sm:$0xff]
    %v1701 = vld [vmem:[#allocation2 + $0x18] sm:$0xff]
    %v1702 = vld [vmem:[%s182] ss:$8 sm:$0x3]
    %v1704 = vperm.slane %v1702, 0
    %v1705 = vperm.slane %v1702, 1
    %1706 = vrot.lane.b32.xlu0 %v1704, 1
    %v1707 = vpop.permute.xlu0 %1706
    %1708 = vrot.lane.b32.xlu0 %v1705, 1
    %v1709 = vpop.permute.xlu0 %1708
    %v1710 = vsel %vm276, %v1707, %v1709
    %v1714 = vmul.f32 %v1699, %v1707
    %v1715 = vmul.f32 %v1700, %v1710
    %v1716 = vmul.f32 %v1701, %v1709
    %1720 = vrot.lane.b32.xlu0 %v1714, 127
    %v1721 = vpop.permute.xlu0 %1720
    %1722 = vrot.lane.b32.xlu0 %v1715, 127
    %v1723 = vpop.permute.xlu0 %1722
    %1724 = vrot.lane.b32.xlu0 %v1716, 127
    %v1725 = vpop.permute.xlu0 %1724
    %v1726 = vsel %vm259, %v1721, %v1723
    %v1727 = vsel %vm259, %v1723, %v1725
    %1730 = vst [vmem:[#allocation3 + $0xa0] sm:$0xff] %v1726
    %1731 = vst [vmem:[#allocation3 + $0xa8] sm:$0xff] %v1727
    %v1732 = vld [vmem:[#allocation2 + $0x20] sm:$0xff]
    %v1733 = vld [vmem:[#allocation2 + $0x28] sm:$0xff]
    %v1734 = vld [vmem:[#allocation2 + $0x30] sm:$0xff]
    %v1735 = vld [vmem:[%s182] ss:$8 sm:$0x3]
    %v1737 = vperm.slane %v1735, 0
    %v1738 = vperm.slane %v1735, 1
    %1739 = vrot.lane.b32.xlu0 %v1737, 1
    %v1740 = vpop.permute.xlu0 %1739
    %1741 = vrot.lane.b32.xlu0 %v1738, 1
    %v1742 = vpop.permute.xlu0 %1741
    %v1743 = vsel %vm276, %v1740, %v1742
    %v1747 = vmul.f32 %v1732, %v1740
    %v1748 = vmul.f32 %v1733, %v1743
    %v1749 = vmul.f32 %v1734, %v1742
    %1753 = vrot.lane.b32.xlu0 %v1747, 127
    %v1754 = vpop.permute.xlu0 %1753
    %1755 = vrot.lane.b32.xlu0 %v1748, 127
    %v1756 = vpop.permute.xlu0 %1755
    %1757 = vrot.lane.b32.xlu0 %v1749, 127
    %v1758 = vpop.permute.xlu0 %1757
    %v1759 = vsel %vm259, %v1754, %v1756
    %v1760 = vsel %vm259, %v1756, %v1758
    %1763 = vst [vmem:[#allocation3 + $0xb0] sm:$0xff] %v1759
    %1764 = vst [vmem:[#allocation3 + $0xb8] sm:$0xff] %v1760
    %v1765 = vld [vmem:[#allocation2 + $0x8] sm:$0xff]
    %v1766 = vld [vmem:[#allocation2 + $0x10] sm:$0xff]
    %v1767 = vld [vmem:[#allocation2 + $0x18] sm:$0xff]
    %v1768 = vld [vmem:[#allocation7] ss:$8 sm:$0x3]
    %v1770 = vperm.slane %v1768, 0
    %v1771 = vperm.slane %v1768, 1
    %1772 = vrot.lane.b32.xlu0 %v1770, 15
    %v1773 = vpop.permute.xlu0 %1772
    %1774 = vrot.lane.b32.xlu0 %v1771, 15
    %v1775 = vpop.permute.xlu0 %1774
    %v1776 = vsel %vm208, %v1773, %v1775
    %v1780 = vmul.f32 %v1765, %v1773
    %v1781 = vmul.f32 %v1766, %v1776
    %v1782 = vmul.f32 %v1767, %v1775
    %1786 = vrot.lane.b32.xlu0 %v1780, 113
    %v1787 = vpop.permute.xlu0 %1786
    %1788 = vrot.lane.b32.xlu0 %v1781, 113
    %v1789 = vpop.permute.xlu0 %1788
    %1790 = vrot.lane.b32.xlu0 %v1782, 113
    %v1791 = vpop.permute.xlu0 %1790
    %v1792 = vsel %vm191, %v1787, %v1789
    %v1793 = vsel %vm191, %v1789, %v1791
    %1796 = vst [vmem:[#allocation3 + $0xc0] sm:$0xff] %v1792
    %1797 = vst [vmem:[#allocation3 + $0xc8] sm:$0xff] %v1793
    %v1798 = vld [vmem:[#allocation2 + $0x20] sm:$0xff]
    %v1799 = vld [vmem:[#allocation2 + $0x28] sm:$0xff]
    %v1800 = vld [vmem:[#allocation2 + $0x30] sm:$0xff]
    %v1801 = vld [vmem:[#allocation7] ss:$8 sm:$0x3]
    %v1803 = vperm.slane %v1801, 0
    %v1804 = vperm.slane %v1801, 1
    %1805 = vrot.lane.b32.xlu0 %v1803, 15
    %v1806 = vpop.permute.xlu0 %1805
    %1807 = vrot.lane.b32.xlu0 %v1804, 15
    %v1808 = vpop.permute.xlu0 %1807
    %v1809 = vsel %vm208, %v1806, %v1808
    %v1813 = vmul.f32 %v1798, %v1806
    %v1814 = vmul.f32 %v1799, %v1809
    %v1815 = vmul.f32 %v1800, %v1808
    %1819 = vrot.lane.b32.xlu0 %v1813, 113
    %v1820 = vpop.permute.xlu0 %1819
    %1821 = vrot.lane.b32.xlu0 %v1814, 113
    %v1822 = vpop.permute.xlu0 %1821
    %1823 = vrot.lane.b32.xlu0 %v1815, 113
    %v1824 = vpop.permute.xlu0 %1823
    %v1825 = vsel %vm191, %v1820, %v1822
    %v1826 = vsel %vm191, %v1822, %v1824
    %1829 = vst [vmem:[#allocation3 + $0xd0] sm:$0xff] %v1825
    %1830 = vst [vmem:[#allocation3 + $0xd8] sm:$0xff] %v1826
    %v1831 = vld [vmem:[#allocation2 + $0x8] sm:$0xff]
    %v1832 = vld [vmem:[#allocation2 + $0x10] sm:$0xff]
    %v1833 = vld [vmem:[#allocation2 + $0x18] sm:$0xff]
    %1837 = vrot.lane.b32.xlu0 %v1831, 112
    %v1838 = vpop.permute.xlu0 %1837
    %1839 = vrot.lane.b32.xlu0 %v1832, 112
    %v1840 = vpop.permute.xlu0 %1839
    %1841 = vrot.lane.b32.xlu0 %v1833, 112
    %v1842 = vpop.permute.xlu0 %1841
    %v1843 = vsel %vm468, %v1838, %v1840
    %v1844 = vsel %vm468, %v1840, %v1842
    %1847 = vst [vmem:[#allocation3 + $0xe0] sm:$0xff] %v1843
    %1848 = vst [vmem:[#allocation3 + $0xe8] sm:$0xff] %v1844
    %v1849 = vld [vmem:[#allocation2 + $0x20] sm:$0xff]
    %v1850 = vld [vmem:[#allocation2 + $0x28] sm:$0xff]
    %v1851 = vld [vmem:[#allocation2 + $0x30] sm:$0xff]
    %1855 = vrot.lane.b32.xlu0 %v1849, 112
    %v1856 = vpop.permute.xlu0 %1855
    %1857 = vrot.lane.b32.xlu0 %v1850, 112
    %v1858 = vpop.permute.xlu0 %1857
    %1859 = vrot.lane.b32.xlu0 %v1851, 112
    %v1860 = vpop.permute.xlu0 %1859
    %v1861 = vsel %vm468, %v1856, %v1858
    %v1862 = vsel %vm468, %v1858, %v1860
    %1865 = vst [vmem:[#allocation3 + $0xf0] sm:$0xff] %v1861
    %1866 = vst [vmem:[#allocation3 + $0xf8] sm:$0xff] %v1862
    %v1867 = vld [vmem:[#allocation2 + $0x8] sm:$0xff]
    %v1868 = vld [vmem:[#allocation2 + $0x10] sm:$0xff]
    %v1869 = vld [vmem:[#allocation2 + $0x18] sm:$0xff]
    %v1870 = vld [vmem:[%s182] ss:$8 sm:$0x3]
    %v1872 = vperm.slane %v1870, 0
    %v1873 = vperm.slane %v1870, 1
    %1874 = vrot.lane.b32.xlu0 %v1872, 17
    %v1875 = vpop.permute.xlu0 %1874
    %1876 = vrot.lane.b32.xlu0 %v1873, 17
    %v1877 = vpop.permute.xlu0 %1876
    %v1878 = vsel %vm102, %v1875, %v1877
    %v1882 = vmul.f32 %v1867, %v1875
    %v1883 = vmul.f32 %v1868, %v1878
    %v1884 = vmul.f32 %v1869, %v1877
    %1888 = vrot.lane.b32.xlu0 %v1882, 111
    %v1889 = vpop.permute.xlu0 %1888
    %1890 = vrot.lane.b32.xlu0 %v1883, 111
    %v1891 = vpop.permute.xlu0 %1890
    %1892 = vrot.lane.b32.xlu0 %v1884, 111
    %v1893 = vpop.permute.xlu0 %1892
    %v1894 = vsel %vm85, %v1889, %v1891
    %v1895 = vsel %vm85, %v1891, %v1893
    %1898 = vst [vmem:[#allocation3 + $0x100] sm:$0xff] %v1894
    %1899 = vst [vmem:[#allocation3 + $0x108] sm:$0xff] %v1895
    %v1900 = vld [vmem:[#allocation2 + $0x20] sm:$0xff]
    %v1901 = vld [vmem:[#allocation2 + $0x28] sm:$0xff]
    %v1902 = vld [vmem:[#allocation2 + $0x30] sm:$0xff]
    %v1903 = vld [vmem:[%s182] ss:$8 sm:$0x3]
    %v1905 = vperm.slane %v1903, 0
    %v1906 = vperm.slane %v1903, 1
    %1907 = vrot.lane.b32.xlu0 %v1905, 17
    %v1908 = vpop.permute.xlu0 %1907
    %1909 = vrot.lane.b32.xlu0 %v1906, 17
    %v1910 = vpop.permute.xlu0 %1909
    %v1911 = vsel %vm102, %v1908, %v1910
    %v1915 = vmul.f32 %v1900, %v1908
    %v1916 = vmul.f32 %v1901, %v1911
    %v1917 = vmul.f32 %v1902, %v1910
    %1921 = vrot.lane.b32.xlu0 %v1915, 111
    %v1922 = vpop.permute.xlu0 %1921
    %1923 = vrot.lane.b32.xlu0 %v1916, 111
    %v1924 = vpop.permute.xlu0 %1923
    %1925 = vrot.lane.b32.xlu0 %v1917, 111
    %v1926 = vpop.permute.xlu0 %1925
    %v1927 = vsel %vm85, %v1922, %v1924
    %v1928 = vsel %vm85, %v1924, %v1926
    %1931 = vst [vmem:[#allocation3 + $0x110] sm:$0xff] %v1927
    %1932 = vst [vmem:[#allocation3 + $0x118] sm:$0xff] %v1928
    %v1933 = vld [vmem:[%s1 + $0x10] sm:$0xf]
    %v1934 = vld [vmem:[#allocation3] sm:$0xff]
    %v1935 = vld [vmem:[#allocation3 + $0x8] sm:$0xff]
    %v1936 = vld [vmem:[#allocation3 + $0x10] sm:$0xff]
    %v1937 = vld [vmem:[#allocation3 + $0x18] sm:$0xff]
    %v1938 = vld [vmem:[#allocation3 + $0x20] sm:$0xff]
    %v1939 = vld [vmem:[#allocation3 + $0x28] sm:$0xff]
    %v1940 = vld [vmem:[#allocation3 + $0x30] sm:$0xff]
    %v1941 = vld [vmem:[#allocation3 + $0x38] sm:$0xff]
    %v1942 = vld [vmem:[#allocation3 + $0x40] sm:$0xff]
    %v1943 = vld [vmem:[#allocation3 + $0x48] sm:$0xff]
    %v1944 = vld [vmem:[#allocation3 + $0x50] sm:$0xff]
    %v1945 = vld [vmem:[#allocation3 + $0x58] sm:$0xff]
    %v1946 = vld [vmem:[#allocation3 + $0x60] sm:$0xff]
    %v1947 = vld [vmem:[#allocation3 + $0x68] sm:$0xff]
    %v1948 = vld [vmem:[#allocation3 + $0x70] sm:$0xff]
    %v1949 = vld [vmem:[#allocation3 + $0x78] sm:$0xff]
    %v1950 = vld [vmem:[#allocation3 + $0x80] sm:$0xff]
    %v1951 = vld [vmem:[#allocation3 + $0x88] sm:$0xff]
    %v1952 = vld [vmem:[#allocation3 + $0x90] sm:$0xff]
    %v1953 = vld [vmem:[#allocation3 + $0x98] sm:$0xff]
    %v1954 = vld [vmem:[#allocation3 + $0xa0] sm:$0xff]
    %v1955 = vld [vmem:[#allocation3 + $0xa8] sm:$0xff]
    %v1956 = vld [vmem:[#allocation3 + $0xb0] sm:$0xff]
    %v1957 = vld [vmem:[#allocation3 + $0xb8] sm:$0xff]
    %v1958 = vld [vmem:[#allocation3 + $0xc0] sm:$0xff]
    %v1959 = vld [vmem:[#allocation3 + $0xc8] sm:$0xff]
    %v1960 = vld [vmem:[#allocation3 + $0xd0] sm:$0xff]
    %v1961 = vld [vmem:[#allocation3 + $0xd8] sm:$0xff]
    %v1962 = vld [vmem:[#allocation3 + $0xe0] sm:$0xff]
    %v1963 = vld [vmem:[#allocation3 + $0xe8] sm:$0xff]
    %v1964 = vld [vmem:[#allocation3 + $0xf0] sm:$0xff]
    %v1965 = vld [vmem:[#allocation3 + $0xf8] sm:$0xff]
    %v1966 = vld [vmem:[#allocation3 + $0x100] sm:$0xff]
    %v1967 = vld [vmem:[#allocation3 + $0x108] sm:$0xff]
    %v1968 = vld [vmem:[#allocation3 + $0x110] sm:$0xff]
    %v1969 = vld [vmem:[#allocation3 + $0x118] sm:$0xff]
    %v1970 = vld [vmem:[%s2 + $0x10] sm:$0xf]
    %1972 = vset.pattern.permute.xlu0 0
    %1973 = vperm.xlu0 %1972, %v1970
    %v1974 = vpop.permute.xlu0 %1973
    %v1977 = vsel %vm602, %v1933, 0
    %1979 = vmatpush.msra.mxu0 0.0
    %1980 = vmatpush.msra.mxu0 0.0
    %1981 = vmatpush.msra.mxu0 0.0
    %1982 = vmatpush.msra.mxu0 0.0
    %1983 = vmatpush.msra.mxu0 0.0
    %1984 = vmatpush.msra.mxu0 0.0
    %1985 = vmatpush.msra.mxu0 0.0
    %1986 = vmatpush.msra.mxu0 %v1966
    %1987 = vmatpush.msra.mxu0 %v1962
    %1988 = vmatpush.msra.mxu0 %v1958
    %1989 = vmatpush.msra.mxu0 %v1954
    %1990 = vmatpush.msra.mxu0 %v1950
    %1991 = vmatpush.msra.mxu0 %v1946
    %1992 = vmatpush.msra.mxu0 %v1942
    %1993 = vmatpush.msra.mxu0 %v1938
    %1994 = vmatpush.msra.mxu0 %v1934
    %1995 = vmatmul.f32.gmra.mxu0 %v1977
    %v1996 = vpop.f32.mrf.mxu0
    %v1997 = vadd.f32 %v1974, %v1996
    %1998 = vdwg.mxu0
    %1999 = vmatpush.msra.mxu0 0.0
    %2000 = vmatpush.msra.mxu0 0.0
    %2001 = vmatpush.msra.mxu0 0.0
    %2002 = vmatpush.msra.mxu0 0.0
    %2003 = vmatpush.msra.mxu0 0.0
    %2004 = vmatpush.msra.mxu0 0.0
    %2005 = vmatpush.msra.mxu0 0.0
    %2006 = vmatpush.msra.mxu0 %v1967
    %2007 = vmatpush.msra.mxu0 %v1963
    %2008 = vmatpush.msra.mxu0 %v1959
    %2009 = vmatpush.msra.mxu0 %v1955
    %2010 = vmatpush.msra.mxu0 %v1951
    %2011 = vmatpush.msra.mxu0 %v1947
    %2012 = vmatpush.msra.mxu0 %v1943
    %2013 = vmatpush.msra.mxu0 %v1939
    %2014 = vmatpush.msra.mxu0 %v1935
    %2015 = vmatmul.f32.gmra.mxu0 %v1977
    %v2016 = vpop.f32.mrf.mxu0
    %v2017 = vadd.f32 %v1974, %v2016
    %2018 = vdwg.mxu0
    %2019 = vmatpush.msra.mxu0 0.0
    %2020 = vmatpush.msra.mxu0 0.0
    %2021 = vmatpush.msra.mxu0 0.0
    %2022 = vmatpush.msra.mxu0 0.0
    %2023 = vmatpush.msra.mxu0 0.0
    %2024 = vmatpush.msra.mxu0 0.0
    %2025 = vmatpush.msra.mxu0 0.0
    %2026 = vmatpush.msra.mxu0 %v1968
    %2027 = vmatpush.msra.mxu0 %v1964
    %2028 = vmatpush.msra.mxu0 %v1960
    %2029 = vmatpush.msra.mxu0 %v1956
    %2030 = vmatpush.msra.mxu0 %v1952
    %2031 = vmatpush.msra.mxu0 %v1948
    %2032 = vmatpush.msra.mxu0 %v1944
    %2033 = vmatpush.msra.mxu0 %v1940
    %2034 = vmatpush.msra.mxu0 %v1936
    %2035 = vmatmul.f32.gmra.mxu0 %v1977
    %v2036 = vpop.f32.mrf.mxu0
    %v2037 = vadd.f32 %v1974, %v2036
    %2038 = vdwg.mxu0
    %2039 = vmatpush.msra.mxu0 0.0
    %2040 = vmatpush.msra.mxu0 0.0
    %2041 = vmatpush.msra.mxu0 0.0
    %2042 = vmatpush.msra.mxu0 0.0
    %2043 = vmatpush.msra.mxu0 0.0
    %2044 = vmatpush.msra.mxu0 0.0
    %2045 = vmatpush.msra.mxu0 0.0
    %2046 = vmatpush.msra.mxu0 %v1969
    %2047 = vmatpush.msra.mxu0 %v1965
    %2048 = vmatpush.msra.mxu0 %v1961
    %2049 = vmatpush.msra.mxu0 %v1957
    %2050 = vmatpush.msra.mxu0 %v1953
    %2051 = vmatpush.msra.mxu0 %v1949
    %2052 = vmatpush.msra.mxu0 %v1945
    %2053 = vmatpush.msra.mxu0 %v1941
    %2054 = vmatpush.msra.mxu0 %v1937
    %2055 = vmatmul.f32.gmra.mxu0 %v1977
    %v2056 = vpop.f32.mrf.mxu0
    %v2057 = vadd.f32 %v1974, %v2056
    %2058 = vdwg.mxu0
    %vm2059 = vcmp.ge.f32.partialorder %v1997, 0.0
    %vm2060 = vcmp.ge.f32.partialorder %v2017, 0.0
    %vm2061 = vcmp.ge.f32.partialorder %v2037, 0.0
    %vm2062 = vcmp.ge.f32.partialorder %v2057, 0.0
    %v2063 = vmul.f32 %v1997, 0.01
    %v2064 = vmul.f32 %v2017, 0.01
    %v2065 = vmul.f32 %v2037, 0.01
    %v2066 = vmul.f32 %v2057, 0.01
    %v2067 = vsel %vm2059, %v1997, %v2063
    %v2068 = vsel %vm2060, %v2017, %v2064
    %v2069 = vsel %vm2061, %v2037, %v2065
    %v2070 = vsel %vm2062, %v2057, %v2066
    %v2073 = vrot.slane %v2068, 4
    %vm2074 = vcmask 1043456
    %v2075 = vsel %vm2074, %v2067, %v2073
    %2077 = vst [vmem:[#allocation9] sm:$0xff] %v2075
    %v2080 = vrot.slane %v2070, 4
    %v2081 = vsel %vm2074, %v2069, %v2080
    %s2083 = scalar_lea.vmem [#allocation9], 8
    %2084 = vst [vmem:[%s2083] sm:$0xff] %v2081
    // Predicated region
    $region26: #{tpu_custom_call.1} parent=1 // pred_check
      _
    $region27: #{tpu_custom_call.1} parent=1 // pred_check_branch
      %2086 = sbr.rel (0) target = $region29
    $region28: #{tpu_custom_call.1} parent=1 // pred_region
      %2088 = vsyncadd [#allocation6], 0
      %s2089 = sshll.u32 [#allocation9], 4
      %s2090 = int_to_ptr.vmem [resolvable:$true] %s2089
      %s2091 = sshll.u32 %s4, 4
      %s2092 = int_to_ptr.hbm [resolvable:$true] %s2091
      %2097 = dma.vmem_to_hbm [thread:$0]  %s2090, 256, %s2092, [#allocation6], 128, 128, 8
    $region29: #{tpu_custom_call.1} parent=1 // pred_fallthru
      _
    // Predicated region
    $region30: #{tpu_custom_call.1} parent=1 // pred_check
      _
    $region31: #{tpu_custom_call.1} parent=1 // pred_check_branch
      %2099 = sbr.rel (0) target = $region33
    $region32: #{tpu_custom_call.1} parent=1 // pred_region
      %2101 = dma.done [#allocation6], 256
    $region33: #{tpu_custom_call.1} parent=1 // pred_fallthru
      _
    %2102 = vsyncpa [#allocation5], 1
    %2103 = vsyncpa [#allocation8], 1
    %2104 = vsyncpa [#allocation6], 1

</llo_original>
